<compile_context>
chip_gen: v6e
topology: v6e:2x2x1
jax: 0.10.0
libtpu: 0.0.40
codegen_flags: <defaults>
</compile_context>

<pallas_src>
import jax
import jax.numpy as jnp
from jax.experimental import pallas as pl
from jax.experimental.pallas import tpu as pltpu


def _round_up(a, m):
    return -(-a // m) * m


def _vae_kernel(
    # streamed, row-tiled inputs
    x_ref, eps_ref,
    # resident encoder params
    ew1_ref, eb1_ref, ew2_ref, eb2_ref, ew3_ref, eb3_ref,
    # resident decoder params
    dw1_ref, db1_ref, dw2_ref, db2_ref, dw3_ref, db3_ref,
    # outputs
    mulv_ref, z0_ref, recon_ref,
):
    f32 = jnp.float32
    bf16 = jnp.bfloat16

    TB = x_ref.shape[0]
    Zp = ew3_ref.shape[1] // 2           # padded z width (multiple of 128)
    S = eps_ref.shape[1] // Zp           # n_samples
    Dp = dw3_ref.shape[1]                # padded input_dim (multiple of 128)

    # ---- GaussianEncoder (bf16 MXU matmuls, f32 accumulation / elementwise) ----
    x = x_ref[...]                                               # bf16 [TB, Dp]
    h = jnp.maximum(
        jnp.dot(x, ew1_ref[...], preferred_element_type=f32) + eb1_ref[...], 0.0)
    h = jnp.maximum(
        jnp.dot(h.astype(bf16), ew2_ref[...], preferred_element_type=f32)
        + eb2_ref[...], 0.0)
    # fused fc3: one matmul, one lane-dense (TB, 2*Zp) output slab  [mu | logvar]
    mlv = (jnp.dot(h.astype(bf16), ew3_ref[...], preferred_element_type=f32)
           + eb3_ref[...])
    mulv_ref[...] = mlv

    mu = mlv[:, :Zp]
    std = jnp.exp(0.5 * mlv[:, Zp:])

    # ---- reparameterize: pure VPU broadcast; per-sample lane-dense z0 stores ----
    z_rows = []
    for s in range(S):                                           # static unroll
        eps_s = eps_ref[:, s * Zp:(s + 1) * Zp].astype(f32)
        z_s = mu + std * eps_s
        z0_ref[:, s * Zp:(s + 1) * Zp] = z_s                     # direct store
        z_rows.append(z_s.astype(bf16))
    z_all = jnp.concatenate(z_rows, axis=0)                      # (S*TB, Zp) bf16

    # ---- BernoulliDecoder: fc1/fc2 batched across samples (M = S*TB) ----
    hd = jnp.maximum(
        jnp.dot(z_all, dw1_ref[...], preferred_element_type=f32) + db1_ref[...], 0.0)
    hd = jnp.maximum(
        jnp.dot(hd.astype(bf16), dw2_ref[...], preferred_element_type=f32)
        + db2_ref[...], 0.0)
    hd = hd.astype(bf16)

    # fc3 + sigmoid per sample: bounds the live slab to one (TB, Dp) tile and
    # lets each lane-dense store overlap the next sample's matmul.
    dw3 = dw3_ref[...]
    db3_b = jnp.broadcast_to(db3_ref[...], (TB, Dp))             # hoisted
    for s in range(S):                                           # static unroll
        logits = jnp.dot(hd[s * TB:(s + 1) * TB, :], dw3,
                         preferred_element_type=f32) + db3_b
        recon_ref[:, s * Dp:(s + 1) * Dp] = (
            jax.nn.sigmoid(logits).astype(recon_ref.dtype))


def make_vae_params(key, input_dim, z_dim, hidden_dim):
    """Xavier-normal weights (matching torch init stats), zero biases.

    Weights are built directly in 128-lane-padded layout (zeros in the padded
    rows/columns) and stored as bfloat16.
    """
    Dp = _round_up(input_dim, 128)
    Hp = _round_up(hidden_dim, 128)
    Zp = _round_up(z_dim, 128)

    def xavier_padded(k, fan_in, fan_out, pad_shape, col_map):
        # torch.nn.init.xavier_normal_: std = sqrt(2 / (fan_in + fan_out))
        std = (2.0 / (fan_in + fan_out)) ** 0.5
        w = std * jax.random.normal(k, (fan_in, fan_out), dtype=jnp.float32)
        wp = jnp.zeros(pad_shape, jnp.float32)
        for dst_col, src_col, width in col_map:
            wp = wp.at[:fan_in, dst_col:dst_col + width].set(
                w[:, src_col:src_col + width])
        return wp.astype(jnp.bfloat16)

    keys = jax.random.split(key, 6)
    p = {}
    p["ew1"] = xavier_padded(keys[0], input_dim, hidden_dim, (Dp, Hp),
                             [(0, 0, hidden_dim)])
    p["eb1"] = jnp.zeros((1, Hp), jnp.float32)
    p["ew2"] = xavier_padded(keys[1], hidden_dim, hidden_dim, (Hp, Hp),
                             [(0, 0, hidden_dim)])
    p["eb2"] = jnp.zeros((1, Hp), jnp.float32)
    # fused mu|logvar head, column layout [mu(0:z) ... | logvar(Zp:Zp+z) ...]
    p["ew3"] = xavier_padded(keys[2], hidden_dim, 2 * z_dim, (Hp, 2 * Zp),
                             [(0, 0, z_dim), (Zp, z_dim, z_dim)])
    p["eb3"] = jnp.zeros((1, 2 * Zp), jnp.float32)
    p["dw1"] = xavier_padded(keys[3], z_dim, hidden_dim, (Zp, Hp),
                             [(0, 0, hidden_dim)])
    p["db1"] = jnp.zeros((1, Hp), jnp.float32)
    p["dw2"] = xavier_padded(keys[4], hidden_dim, hidden_dim, (Hp, Hp),
                             [(0, 0, hidden_dim)])
    p["db2"] = jnp.zeros((1, Hp), jnp.float32)
    p["dw3"] = xavier_padded(keys[5], hidden_dim, input_dim, (Hp, Dp),
                             [(0, 0, input_dim)])
    p["db3"] = jnp.zeros((1, Dp), jnp.float32)
    return p


def vae_forward(x, eps, params, *, n_samples, z_dim, input_dim, hidden_dim,
                tile_b=512):
    """x: [B, input_dim] f32, eps: [B, n_samples, z_dim] standard-normal f32.

    Returns (recon_x_mu[bf16], z0, z0_mu, z0_logvar) matching the PyTorch
    VAE.forward default-config outputs (recon emitted in bfloat16).
    """
    B = x.shape[0]
    S = n_samples
    Dp = _round_up(input_dim, 128)
    Hp = _round_up(hidden_dim, 128)
    Zp = _round_up(z_dim, 128)

    # Row tile: multiple of 16 (bf16 sublane packing); cap so the grid has >=2
    # steps whenever the batch allows (v7x has two TensorCores to feed).
    TB = min(tile_b, _round_up(max(B // 2, 1), 16))
    TB = max(16, (TB // 16) * 16)
    B_pad = _round_up(B, TB)

    x_bf = jnp.pad(x.astype(jnp.bfloat16),
                   ((0, B_pad - B), (0, Dp - input_dim)))
    eps_bf = jnp.pad(eps.astype(jnp.bfloat16),
                     ((0, B_pad - B), (0, 0), (0, Zp - z_dim)))
    eps_bf = eps_bf.reshape(B_pad, S * Zp)

    grid = (B_pad // TB,)

    def row(width):
        return pl.BlockSpec((TB, width), lambda i: (i, 0))

    def resident(arr):
        return pl.BlockSpec(arr.shape, lambda i: (0, 0))        # stays in VMEM

    in_specs = [
        row(Dp), row(S * Zp),
        resident(params["ew1"]), resident(params["eb1"]),
        resident(params["ew2"]), resident(params["eb2"]),
        resident(params["ew3"]), resident(params["eb3"]),
        resident(params["dw1"]), resident(params["db1"]),
        resident(params["dw2"]), resident(params["db2"]),
        resident(params["dw3"]), resident(params["db3"]),
    ]
    out_specs = (row(2 * Zp), row(S * Zp), row(S * Dp))
    out_shapes = (
        jax.ShapeDtypeStruct((B_pad, 2 * Zp), jnp.float32),       # mu|logvar
        jax.ShapeDtypeStruct((B_pad, S * Zp), jnp.float32),       # z0 (flat)
        jax.ShapeDtypeStruct((B_pad, S * Dp), jnp.bfloat16),      # recon (bf16)
    )

    # --- explicit VMEM budget (per the perf review) ---
    def nbytes(a):
        return int(a.size) * a.dtype.itemsize
    w_bytes = sum(nbytes(params[k]) for k in params)
    stream_in = TB * Dp * 2 + TB * S * Zp * 2                      # bf16 tiles
    stream_out = TB * 2 * Zp * 4 + TB * S * Zp * 4 + TB * S * Dp * 2
    act_bytes = 2 * (S * TB) * Hp * 4 + 2 * TB * Dp * 4            # rough scratch
    vmem_need = 2 * w_bytes + 2 * stream_in + 2 * stream_out + act_bytes
    vmem_limit = int(min(max(2 * vmem_need, 32 << 20), 64 << 20))  # v7x-safe cap

    H = Hp
    flops = (2 * B_pad * (Dp * H + H * H + H * 2 * Zp)
             + 2 * B_pad * S * (Zp * H + H * H + H * Dp))
    transc = B_pad * Zp + B_pad * S * Dp
    io_bytes = (B_pad * Dp * 2 + B_pad * S * Zp * 2
                + B_pad * 2 * Zp * 4 + B_pad * S * Zp * 4 + B_pad * S * Dp * 2)

    mulv, z0_flat, recon_flat = pl.pallas_call(
        _vae_kernel,
        grid=grid,
        in_specs=in_specs,
        out_specs=out_specs,
        out_shape=out_shapes,
        compiler_params=pltpu.CompilerParams(
            dimension_semantics=("parallel",),
            vmem_limit_bytes=vmem_limit),
        cost_estimate=pl.CostEstimate(
            flops=flops, transcendentals=transc,
            bytes_accessed=w_bytes + io_bytes),
    )(
        x_bf, eps_bf,
        params["ew1"], params["eb1"], params["ew2"], params["eb2"],
        params["ew3"], params["eb3"],
        params["dw1"], params["db1"], params["dw2"], params["db2"],
        params["dw3"], params["db3"],
    )

    # glue: slices / reshapes back to the PyTorch return shapes
    mu = mulv[:B, :z_dim]
    logvar = mulv[:B, Zp:Zp + z_dim]
    z0 = z0_flat[:B].reshape(B, S, Zp)[:, :, :z_dim]
    recon_x_mu = recon_flat[:B].reshape(B, S, Dp)[:, :, :input_dim]
    z0_mu = jnp.broadcast_to(mu[:, None, :], (B, S, z_dim))
    z0_logvar = jnp.broadcast_to(logvar[:, None, :], (B, S, z_dim))
    return recon_x_mu, z0, z0_mu, z0_logvar


if __name__ == "__main__":
    B = 64
    INPUT_DIM = 32
    Z_DIM = 8
    HIDDEN_DIM = 32
    N_SAMPLES = 4
    TILE_B = 16          # small tile so the test exercises a multi-step grid

    root = jax.random.PRNGKey(0)
    k_param, k_x, k_eps = jax.random.split(root, 3)

    params = make_vae_params(k_param, INPUT_DIM, Z_DIM, HIDDEN_DIM)
    x = jax.random.uniform(k_x, (B, INPUT_DIM), dtype=jnp.float32)
    eps = jax.random.normal(k_eps, (B, N_SAMPLES, Z_DIM), dtype=jnp.float32)

    recon_x_mu, z0, z0_mu, z0_logvar = vae_forward(
        x, eps, params,
        n_samples=N_SAMPLES, z_dim=Z_DIM,
        input_dim=INPUT_DIM, hidden_dim=HIDDEN_DIM,
        tile_b=TILE_B,
    )
    jax.block_until_ready((recon_x_mu, z0, z0_mu, z0_logvar))

    # pure-JAX reference using the same padded bf16-weight / f32-accum recipe
    def ref_forward(x, eps, p):
        f32, bf16 = jnp.float32, jnp.bfloat16
        Dp = p["ew1"].shape[0]
        Zp = p["dw1"].shape[0]

        def lin(a, w, b):
            return jnp.dot(a.astype(bf16), w, preferred_element_type=f32) + b

        xb = jnp.pad(x.astype(bf16), ((0, 0), (0, Dp - x.shape[1])))
        eb = jnp.pad(eps.astype(bf16),
                     ((0, 0), (0, 0), (0, Zp - eps.shape[2]))).astype(f32)

        h = jax.nn.relu(lin(xb, p["ew1"], p["eb1"]))
        h = jax.nn.relu(lin(h, p["ew2"], p["eb2"]))
        mlv = lin(h, p["ew3"], p["eb3"])
        mu, lv = mlv[:, :Zp], mlv[:, Zp:]
        mu_r = jnp.broadcast_to(mu[:, None, :], (B, N_SAMPLES, Zp))
        lv_r = jnp.broadcast_to(lv[:, None, :], (B, N_SAMPLES, Zp))
        z = mu_r + jnp.exp(0.5 * lv_r) * eb
        z2 = z.reshape(B * N_SAMPLES, Zp)
        hd = jax.nn.relu(lin(z2, p["dw1"], p["db1"]))
        hd = jax.nn.relu(lin(hd, p["dw2"], p["db2"]))
        r = jax.nn.sigmoid(lin(hd, p["dw3"], p["db3"]))
        r = r.reshape(B, N_SAMPLES, -1)
        return (r[:, :, :INPUT_DIM], z[:, :, :Z_DIM],
                mu_r[:, :, :Z_DIM], lv_r[:, :, :Z_DIM])

    r_ref, z_ref, mu_ref_, lv_ref_ = ref_forward(x, eps, params)
    assert recon_x_mu.shape == (B, N_SAMPLES, INPUT_DIM)
    assert z0.shape == (B, N_SAMPLES, Z_DIM)
    # recon is emitted in bfloat16 (perf): compare in f32 with a bf16-aware tol
    assert jnp.allclose(recon_x_mu.astype(jnp.float32), r_ref, atol=2e-2, rtol=2e-2)
    assert jnp.allclose(z0, z_ref, atol=1e-2, rtol=1e-2)
    assert jnp.allclose(z0_mu, mu_ref_, atol=1e-2, rtol=1e-2)
    assert jnp.allclose(z0_logvar, lv_ref_, atol=1e-2, rtol=1e-2)

    print("KERNEL_OK")
</pallas_src>

<mosaic_0001>
module attributes {stable_mosaic.version = 11 : i64} {
  func.func @_vae_kernel(%arg0: i32, %arg1: memref<16x128xbf16, #tpu.memory_space<vmem>>, %arg2: memref<16x512xbf16, #tpu.memory_space<vmem>>, %arg3: memref<128x128xbf16, #tpu.memory_space<vmem>>, %arg4: memref<1x128xf32, #tpu.memory_space<vmem>>, %arg5: memref<128x128xbf16, #tpu.memory_space<vmem>>, %arg6: memref<1x128xf32, #tpu.memory_space<vmem>>, %arg7: memref<128x256xbf16, #tpu.memory_space<vmem>>, %arg8: memref<1x256xf32, #tpu.memory_space<vmem>>, %arg9: memref<128x128xbf16, #tpu.memory_space<vmem>>, %arg10: memref<1x128xf32, #tpu.memory_space<vmem>>, %arg11: memref<128x128xbf16, #tpu.memory_space<vmem>>, %arg12: memref<1x128xf32, #tpu.memory_space<vmem>>, %arg13: memref<128x128xbf16, #tpu.memory_space<vmem>>, %arg14: memref<1x128xf32, #tpu.memory_space<vmem>>, %arg15: memref<16x256xf32, #tpu.memory_space<vmem>>, %arg16: memref<16x512xf32, #tpu.memory_space<vmem>>, %arg17: memref<16x512xbf16, #tpu.memory_space<vmem>>) attributes {dimension_semantics = [#tpu.dimension_semantics<parallel>], iteration_bounds = array<i64: 4>, scalar_prefetch = 0 : i64, scratch_operands = 0 : i64, tpu.core_type = #tpu.core_type<tc>, window_params = [{transform_indices = @transform_0, window_bounds = array<i64: 16, 128>}, {transform_indices = @transform_1, window_bounds = array<i64: 16, 512>}, {pipeline_mode = #tpu.pipeline_mode<synchronous>, transform_indices = @transform_2, window_bounds = array<i64: 128, 128>}, {pipeline_mode = #tpu.pipeline_mode<synchronous>, transform_indices = @transform_3, window_bounds = array<i64: 1, 128>}, {pipeline_mode = #tpu.pipeline_mode<synchronous>, transform_indices = @transform_4, window_bounds = array<i64: 128, 128>}, {pipeline_mode = #tpu.pipeline_mode<synchronous>, transform_indices = @transform_5, window_bounds = array<i64: 1, 128>}, {pipeline_mode = #tpu.pipeline_mode<synchronous>, transform_indices = @transform_6, window_bounds = array<i64: 128, 256>}, {pipeline_mode = #tpu.pipeline_mode<synchronous>, transform_indices = @transform_7, window_bounds = array<i64: 1, 256>}, {pipeline_mode = #tpu.pipeline_mode<synchronous>, transform_indices = @transform_8, window_bounds = array<i64: 128, 128>}, {pipeline_mode = #tpu.pipeline_mode<synchronous>, transform_indices = @transform_9, window_bounds = array<i64: 1, 128>}, {pipeline_mode = #tpu.pipeline_mode<synchronous>, transform_indices = @transform_10, window_bounds = array<i64: 128, 128>}, {pipeline_mode = #tpu.pipeline_mode<synchronous>, transform_indices = @transform_11, window_bounds = array<i64: 1, 128>}, {pipeline_mode = #tpu.pipeline_mode<synchronous>, transform_indices = @transform_12, window_bounds = array<i64: 128, 128>}, {pipeline_mode = #tpu.pipeline_mode<synchronous>, transform_indices = @transform_13, window_bounds = array<i64: 1, 128>}, {transform_indices = @transform_14, window_bounds = array<i64: 16, 256>}, {transform_indices = @transform_15, window_bounds = array<i64: 16, 512>}, {transform_indices = @transform_16, window_bounds = array<i64: 16, 512>}]} {
    %c0 = arith.constant 0 : index
    %c0_0 = arith.constant 0 : index
    %0 = vector.load %arg1[%c0, %c0_0] : memref<16x128xbf16, #tpu.memory_space<vmem>>, vector<16x128xbf16>
    %c0_1 = arith.constant 0 : index
    %c0_2 = arith.constant 0 : index
    %1 = vector.load %arg3[%c0_1, %c0_2] : memref<128x128xbf16, #tpu.memory_space<vmem>>, vector<128x128xbf16>
    %cst = arith.constant dense<0.000000e+00> : vector<16x128xf32>
    %2 = tpu.matmul %0, %1, %cst {dimension_numbers = #tpu.dot_dimension_numbers<[1], [0], [0], [1], [0, 0, 1, 1], [], []>} : vector<16x128xbf16>, vector<128x128xbf16>, vector<16x128xf32> -> vector<16x128xf32>
    %c0_3 = arith.constant 0 : index
    %c0_4 = arith.constant 0 : index
    %3 = vector.load %arg4[%c0_3, %c0_4] : memref<1x128xf32, #tpu.memory_space<vmem>>, vector<1x128xf32>
    %4 = vector.broadcast %3 : vector<1x128xf32> to vector<16x128xf32>
    %5 = arith.addf %2, %4 : vector<16x128xf32>
    %cst_5 = arith.constant 0.000000e+00 : f32
    %6 = vector.broadcast %cst_5 : f32 to vector<16x128xf32>
    %7 = arith.maximumf %5, %6 : vector<16x128xf32>
    %8 = arith.truncf %7 : vector<16x128xf32> to vector<16x128xbf16>
    %c0_6 = arith.constant 0 : index
    %c0_7 = arith.constant 0 : index
    %9 = vector.load %arg5[%c0_6, %c0_7] : memref<128x128xbf16, #tpu.memory_space<vmem>>, vector<128x128xbf16>
    %cst_8 = arith.constant dense<0.000000e+00> : vector<16x128xf32>
    %10 = tpu.matmul %8, %9, %cst_8 {dimension_numbers = #tpu.dot_dimension_numbers<[1], [0], [0], [1], [0, 0, 1, 1], [], []>} : vector<16x128xbf16>, vector<128x128xbf16>, vector<16x128xf32> -> vector<16x128xf32>
    %c0_9 = arith.constant 0 : index
    %c0_10 = arith.constant 0 : index
    %11 = vector.load %arg6[%c0_9, %c0_10] : memref<1x128xf32, #tpu.memory_space<vmem>>, vector<1x128xf32>
    %12 = vector.broadcast %11 : vector<1x128xf32> to vector<16x128xf32>
    %13 = arith.addf %10, %12 : vector<16x128xf32>
    %cst_11 = arith.constant 0.000000e+00 : f32
    %14 = vector.broadcast %cst_11 : f32 to vector<16x128xf32>
    %15 = arith.maximumf %13, %14 : vector<16x128xf32>
    %16 = arith.truncf %15 : vector<16x128xf32> to vector<16x128xbf16>
    %c0_12 = arith.constant 0 : index
    %c0_13 = arith.constant 0 : index
    %17 = vector.load %arg7[%c0_12, %c0_13] : memref<128x256xbf16, #tpu.memory_space<vmem>>, vector<128x256xbf16>
    %cst_14 = arith.constant dense<0.000000e+00> : vector<16x256xf32>
    %18 = tpu.matmul %16, %17, %cst_14 {dimension_numbers = #tpu.dot_dimension_numbers<[1], [0], [0], [1], [0, 0, 1, 1], [], []>} : vector<16x128xbf16>, vector<128x256xbf16>, vector<16x256xf32> -> vector<16x256xf32>
    %c0_15 = arith.constant 0 : index
    %c0_16 = arith.constant 0 : index
    %19 = vector.load %arg8[%c0_15, %c0_16] : memref<1x256xf32, #tpu.memory_space<vmem>>, vector<1x256xf32>
    %20 = vector.broadcast %19 : vector<1x256xf32> to vector<16x256xf32>
    %21 = arith.addf %18, %20 : vector<16x256xf32>
    %c0_17 = arith.constant 0 : index
    %c0_18 = arith.constant 0 : index
    %22 = vector.load %arg15[%c0_17, %c0_18] : memref<16x256xf32, #tpu.memory_space<vmem>>, vector<16x256xf32>
    tpu.vector_store %arg15[%c0_17, %c0_18], %21 {strides = array<i32>} : memref<16x256xf32, #tpu.memory_space<vmem>>, vector<16x256xf32>,
    %23 = vector.extract_strided_slice %21 {offsets = [0, 0], sizes = [16, 128], strides = [1, 1]} : vector<16x256xf32> to vector<16x128xf32>
    %24 = vector.extract_strided_slice %21 {offsets = [0, 128], sizes = [16, 128], strides = [1, 1]} : vector<16x256xf32> to vector<16x128xf32>
    %cst_19 = arith.constant 5.000000e-01 : f32
    %25 = vector.broadcast %cst_19 : f32 to vector<16x128xf32>
    %26 = arith.mulf %25, %24 : vector<16x128xf32>
    %27 = math.exp %26 : vector<16x128xf32>
    %c0_20 = arith.constant 0 : index
    %c0_21 = arith.constant 0 : index
    %28 = vector.load %arg2[%c0_20, %c0_21] : memref<16x512xbf16, #tpu.memory_space<vmem>>, vector<16x128xbf16>
    %29 = arith.extf %28 : vector<16x128xbf16> to vector<16x128xf32>
    %30 = arith.mulf %27, %29 : vector<16x128xf32>
    %31 = arith.addf %23, %30 : vector<16x128xf32>
    %c0_22 = arith.constant 0 : index
    %c0_23 = arith.constant 0 : index
    %32 = vector.load %arg16[%c0_22, %c0_23] : memref<16x512xf32, #tpu.memory_space<vmem>>, vector<16x128xf32>
    tpu.vector_store %arg16[%c0_22, %c0_23], %31 {strides = array<i32>} : memref<16x512xf32, #tpu.memory_space<vmem>>, vector<16x128xf32>,
    %33 = arith.truncf %31 : vector<16x128xf32> to vector<16x128xbf16>
    %c0_24 = arith.constant 0 : index
    %c128 = arith.constant 128 : index
    %34 = vector.load %arg2[%c0_24, %c128] : memref<16x512xbf16, #tpu.memory_space<vmem>>, vector<16x128xbf16>
    %35 = arith.extf %34 : vector<16x128xbf16> to vector<16x128xf32>
    %36 = arith.mulf %27, %35 : vector<16x128xf32>
    %37 = arith.addf %23, %36 : vector<16x128xf32>
    %c0_25 = arith.constant 0 : index
    %c128_26 = arith.constant 128 : index
    %38 = vector.load %arg16[%c0_25, %c128_26] : memref<16x512xf32, #tpu.memory_space<vmem>>, vector<16x128xf32>
    tpu.vector_store %arg16[%c0_25, %c128_26], %37 {strides = array<i32>} : memref<16x512xf32, #tpu.memory_space<vmem>>, vector<16x128xf32>,
    %39 = arith.truncf %37 : vector<16x128xf32> to vector<16x128xbf16>
    %c0_27 = arith.constant 0 : index
    %c256 = arith.constant 256 : index
    %40 = vector.load %arg2[%c0_27, %c256] : memref<16x512xbf16, #tpu.memory_space<vmem>>, vector<16x128xbf16>
    %41 = arith.extf %40 : vector<16x128xbf16> to vector<16x128xf32>
    %42 = arith.mulf %27, %41 : vector<16x128xf32>
    %43 = arith.addf %23, %42 : vector<16x128xf32>
    %c0_28 = arith.constant 0 : index
    %c256_29 = arith.constant 256 : index
    %44 = vector.load %arg16[%c0_28, %c256_29] : memref<16x512xf32, #tpu.memory_space<vmem>>, vector<16x128xf32>
    tpu.vector_store %arg16[%c0_28, %c256_29], %43 {strides = array<i32>} : memref<16x512xf32, #tpu.memory_space<vmem>>, vector<16x128xf32>,
    %45 = arith.truncf %43 : vector<16x128xf32> to vector<16x128xbf16>
    %c0_30 = arith.constant 0 : index
    %c384 = arith.constant 384 : index
    %46 = vector.load %arg2[%c0_30, %c384] : memref<16x512xbf16, #tpu.memory_space<vmem>>, vector<16x128xbf16>
    %47 = arith.extf %46 : vector<16x128xbf16> to vector<16x128xf32>
    %48 = arith.mulf %27, %47 : vector<16x128xf32>
    %49 = arith.addf %23, %48 : vector<16x128xf32>
    %c0_31 = arith.constant 0 : index
    %c384_32 = arith.constant 384 : index
    %50 = vector.load %arg16[%c0_31, %c384_32] : memref<16x512xf32, #tpu.memory_space<vmem>>, vector<16x128xf32>
    tpu.vector_store %arg16[%c0_31, %c384_32], %49 {strides = array<i32>} : memref<16x512xf32, #tpu.memory_space<vmem>>, vector<16x128xf32>,
    %51 = arith.truncf %49 : vector<16x128xf32> to vector<16x128xbf16>
    %52 = tpu.concatenate %33, %39, %45, %51 in 0 : vector<16x128xbf16>, vector<16x128xbf16>, vector<16x128xbf16>, vector<16x128xbf16> -> vector<64x128xbf16>
    %c0_33 = arith.constant 0 : index
    %c0_34 = arith.constant 0 : index
    %53 = vector.load %arg9[%c0_33, %c0_34] : memref<128x128xbf16, #tpu.memory_space<vmem>>, vector<128x128xbf16>
    %cst_35 = arith.constant dense<0.000000e+00> : vector<64x128xf32>
    %54 = tpu.matmul %52, %53, %cst_35 {dimension_numbers = #tpu.dot_dimension_numbers<[1], [0], [0], [1], [0, 0, 1, 1], [], []>} : vector<64x128xbf16>, vector<128x128xbf16>, vector<64x128xf32> -> vector<64x128xf32>
    %c0_36 = arith.constant 0 : index
    %c0_37 = arith.constant 0 : index
    %55 = vector.load %arg10[%c0_36, %c0_37] : memref<1x128xf32, #tpu.memory_space<vmem>>, vector<1x128xf32>
    %56 = vector.broadcast %55 : vector<1x128xf32> to vector<64x128xf32>
    %57 = arith.addf %54, %56 : vector<64x128xf32>
    %cst_38 = arith.constant 0.000000e+00 : f32
    %58 = vector.broadcast %cst_38 : f32 to vector<64x128xf32>
    %59 = arith.maximumf %57, %58 : vector<64x128xf32>
    %60 = arith.truncf %59 : vector<64x128xf32> to vector<64x128xbf16>
    %c0_39 = arith.constant 0 : index
    %c0_40 = arith.constant 0 : index
    %61 = vector.load %arg11[%c0_39, %c0_40] : memref<128x128xbf16, #tpu.memory_space<vmem>>, vector<128x128xbf16>
    %cst_41 = arith.constant dense<0.000000e+00> : vector<64x128xf32>
    %62 = tpu.matmul %60, %61, %cst_41 {dimension_numbers = #tpu.dot_dimension_numbers<[1], [0], [0], [1], [0, 0, 1, 1], [], []>} : vector<64x128xbf16>, vector<128x128xbf16>, vector<64x128xf32> -> vector<64x128xf32>
    %c0_42 = arith.constant 0 : index
    %c0_43 = arith.constant 0 : index
    %63 = vector.load %arg12[%c0_42, %c0_43] : memref<1x128xf32, #tpu.memory_space<vmem>>, vector<1x128xf32>
    %64 = vector.broadcast %63 : vector<1x128xf32> to vector<64x128xf32>
    %65 = arith.addf %62, %64 : vector<64x128xf32>
    %cst_44 = arith.constant 0.000000e+00 : f32
    %66 = vector.broadcast %cst_44 : f32 to vector<64x128xf32>
    %67 = arith.maximumf %65, %66 : vector<64x128xf32>
    %68 = arith.truncf %67 : vector<64x128xf32> to vector<64x128xbf16>
    %c0_45 = arith.constant 0 : index
    %c0_46 = arith.constant 0 : index
    %69 = vector.load %arg13[%c0_45, %c0_46] : memref<128x128xbf16, #tpu.memory_space<vmem>>, vector<128x128xbf16>
    %c0_47 = arith.constant 0 : index
    %c0_48 = arith.constant 0 : index
    %70 = vector.load %arg14[%c0_47, %c0_48] : memref<1x128xf32, #tpu.memory_space<vmem>>, vector<1x128xf32>
    %71 = vector.shape_cast %70 : vector<1x128xf32> to vector<1x128xf32>
    %72 = vector.broadcast %71 : vector<1x128xf32> to vector<16x128xf32>
    %73 = vector.extract_strided_slice %68 {offsets = [0, 0], sizes = [16, 128], strides = [1, 1]} : vector<64x128xbf16> to vector<16x128xbf16>
    %cst_49 = arith.constant dense<0.000000e+00> : vector<16x128xf32>
    %74 = tpu.matmul %73, %69, %cst_49 {dimension_numbers = #tpu.dot_dimension_numbers<[1], [0], [0], [1], [0, 0, 1, 1], [], []>} : vector<16x128xbf16>, vector<128x128xbf16>, vector<16x128xf32> -> vector<16x128xf32>
    %75 = arith.addf %74, %72 : vector<16x128xf32>
    %76 = arith.negf %75 : vector<16x128xf32>
    %77 = math.exp %76 : vector<16x128xf32>
    %cst_50 = arith.constant 1.000000e+00 : f32
    %78 = vector.broadcast %cst_50 : f32 to vector<16x128xf32>
    %79 = arith.addf %78, %77 : vector<16x128xf32>
    %80 = arith.divf %78, %79 : vector<16x128xf32>
    %81 = arith.truncf %80 : vector<16x128xf32> to vector<16x128xbf16>
    %c0_51 = arith.constant 0 : index
    %c0_52 = arith.constant 0 : index
    %82 = vector.load %arg17[%c0_51, %c0_52] : memref<16x512xbf16, #tpu.memory_space<vmem>>, vector<16x128xbf16>
    tpu.vector_store %arg17[%c0_51, %c0_52], %81 {strides = array<i32>} : memref<16x512xbf16, #tpu.memory_space<vmem>>, vector<16x128xbf16>,
    %83 = vector.extract_strided_slice %68 {offsets = [16, 0], sizes = [16, 128], strides = [1, 1]} : vector<64x128xbf16> to vector<16x128xbf16>
    %cst_53 = arith.constant dense<0.000000e+00> : vector<16x128xf32>
    %84 = tpu.matmul %83, %69, %cst_53 {dimension_numbers = #tpu.dot_dimension_numbers<[1], [0], [0], [1], [0, 0, 1, 1], [], []>} : vector<16x128xbf16>, vector<128x128xbf16>, vector<16x128xf32> -> vector<16x128xf32>
    %85 = arith.addf %84, %72 : vector<16x128xf32>
    %86 = arith.negf %85 : vector<16x128xf32>
    %87 = math.exp %86 : vector<16x128xf32>
    %cst_54 = arith.constant 1.000000e+00 : f32
    %88 = vector.broadcast %cst_54 : f32 to vector<16x128xf32>
    %89 = arith.addf %88, %87 : vector<16x128xf32>
    %90 = arith.divf %88, %89 : vector<16x128xf32>
    %91 = arith.truncf %90 : vector<16x128xf32> to vector<16x128xbf16>
    %c0_55 = arith.constant 0 : index
    %c128_56 = arith.constant 128 : index
    %92 = vector.load %arg17[%c0_55, %c128_56] : memref<16x512xbf16, #tpu.memory_space<vmem>>, vector<16x128xbf16>
    tpu.vector_store %arg17[%c0_55, %c128_56], %91 {strides = array<i32>} : memref<16x512xbf16, #tpu.memory_space<vmem>>, vector<16x128xbf16>,
    %93 = vector.extract_strided_slice %68 {offsets = [32, 0], sizes = [16, 128], strides = [1, 1]} : vector<64x128xbf16> to vector<16x128xbf16>
    %cst_57 = arith.constant dense<0.000000e+00> : vector<16x128xf32>
    %94 = tpu.matmul %93, %69, %cst_57 {dimension_numbers = #tpu.dot_dimension_numbers<[1], [0], [0], [1], [0, 0, 1, 1], [], []>} : vector<16x128xbf16>, vector<128x128xbf16>, vector<16x128xf32> -> vector<16x128xf32>
    %95 = arith.addf %94, %72 : vector<16x128xf32>
    %96 = arith.negf %95 : vector<16x128xf32>
    %97 = math.exp %96 : vector<16x128xf32>
    %cst_58 = arith.constant 1.000000e+00 : f32
    %98 = vector.broadcast %cst_58 : f32 to vector<16x128xf32>
    %99 = arith.addf %98, %97 : vector<16x128xf32>
    %100 = arith.divf %98, %99 : vector<16x128xf32>
    %101 = arith.truncf %100 : vector<16x128xf32> to vector<16x128xbf16>
    %c0_59 = arith.constant 0 : index
    %c256_60 = arith.constant 256 : index
    %102 = vector.load %arg17[%c0_59, %c256_60] : memref<16x512xbf16, #tpu.memory_space<vmem>>, vector<16x128xbf16>
    tpu.vector_store %arg17[%c0_59, %c256_60], %101 {strides = array<i32>} : memref<16x512xbf16, #tpu.memory_space<vmem>>, vector<16x128xbf16>,
    %103 = vector.extract_strided_slice %68 {offsets = [48, 0], sizes = [16, 128], strides = [1, 1]} : vector<64x128xbf16> to vector<16x128xbf16>
    %cst_61 = arith.constant dense<0.000000e+00> : vector<16x128xf32>
    %104 = tpu.matmul %103, %69, %cst_61 {dimension_numbers = #tpu.dot_dimension_numbers<[1], [0], [0], [1], [0, 0, 1, 1], [], []>} : vector<16x128xbf16>, vector<128x128xbf16>, vector<16x128xf32> -> vector<16x128xf32>
    %105 = arith.addf %104, %72 : vector<16x128xf32>
    %106 = arith.negf %105 : vector<16x128xf32>
    %107 = math.exp %106 : vector<16x128xf32>
    %cst_62 = arith.constant 1.000000e+00 : f32
    %108 = vector.broadcast %cst_62 : f32 to vector<16x128xf32>
    %109 = arith.addf %108, %107 : vector<16x128xf32>
    %110 = arith.divf %108, %109 : vector<16x128xf32>
    %111 = arith.truncf %110 : vector<16x128xf32> to vector<16x128xbf16>
    %c0_63 = arith.constant 0 : index
    %c384_64 = arith.constant 384 : index
    %112 = vector.load %arg17[%c0_63, %c384_64] : memref<16x512xbf16, #tpu.memory_space<vmem>>, vector<16x128xbf16>
    tpu.vector_store %arg17[%c0_63, %c384_64], %111 {strides = array<i32>} : memref<16x512xbf16, #tpu.memory_space<vmem>>, vector<16x128xbf16>,
    return
  }
  func.func @transform_0(%arg0: i32) -> (i32, i32) {
    %c0_i32 = arith.constant 0 : i32
    %c0_i32_0 = arith.constant 0 : i32
    return %arg0, %c0_i32 : i32, i32
  }
  func.func @transform_1(%arg0: i32) -> (i32, i32) {
    %c0_i32 = arith.constant 0 : i32
    %c0_i32_0 = arith.constant 0 : i32
    return %arg0, %c0_i32 : i32, i32
  }
  func.func @transform_2(%arg0: i32) -> (i32, i32) {
    %c0_i32 = arith.constant 0 : i32
    %c0_i32_0 = arith.constant 0 : i32
    %c0_i32_1 = arith.constant 0 : i32
    return %c0_i32, %c0_i32_0 : i32, i32
  }
  func.func @transform_3(%arg0: i32) -> (i32, i32) {
    %c0_i32 = arith.constant 0 : i32
    %c0_i32_0 = arith.constant 0 : i32
    %c0_i32_1 = arith.constant 0 : i32
    return %c0_i32, %c0_i32_0 : i32, i32
  }
  func.func @transform_4(%arg0: i32) -> (i32, i32) {
    %c0_i32 = arith.constant 0 : i32
    %c0_i32_0 = arith.constant 0 : i32
    %c0_i32_1 = arith.constant 0 : i32
    return %c0_i32, %c0_i32_0 : i32, i32
  }
  func.func @transform_5(%arg0: i32) -> (i32, i32) {
    %c0_i32 = arith.constant 0 : i32
    %c0_i32_0 = arith.constant 0 : i32
    %c0_i32_1 = arith.constant 0 : i32
    return %c0_i32, %c0_i32_0 : i32, i32
  }
  func.func @transform_6(%arg0: i32) -> (i32, i32) {
    %c0_i32 = arith.constant 0 : i32
    %c0_i32_0 = arith.constant 0 : i32
    %c0_i32_1 = arith.constant 0 : i32
    return %c0_i32, %c0_i32_0 : i32, i32
  }
  func.func @transform_7(%arg0: i32) -> (i32, i32) {
    %c0_i32 = arith.constant 0 : i32
    %c0_i32_0 = arith.constant 0 : i32
    %c0_i32_1 = arith.constant 0 : i32
    return %c0_i32, %c0_i32_0 : i32, i32
  }
  func.func @transform_8(%arg0: i32) -> (i32, i32) {
    %c0_i32 = arith.constant 0 : i32
    %c0_i32_0 = arith.constant 0 : i32
    %c0_i32_1 = arith.constant 0 : i32
    return %c0_i32, %c0_i32_0 : i32, i32
  }
  func.func @transform_9(%arg0: i32) -> (i32, i32) {
    %c0_i32 = arith.constant 0 : i32
    %c0_i32_0 = arith.constant 0 : i32
    %c0_i32_1 = arith.constant 0 : i32
    return %c0_i32, %c0_i32_0 : i32, i32
  }
  func.func @transform_10(%arg0: i32) -> (i32, i32) {
    %c0_i32 = arith.constant 0 : i32
    %c0_i32_0 = arith.constant 0 : i32
    %c0_i32_1 = arith.constant 0 : i32
    return %c0_i32, %c0_i32_0 : i32, i32
  }
  func.func @transform_11(%arg0: i32) -> (i32, i32) {
    %c0_i32 = arith.constant 0 : i32
    %c0_i32_0 = arith.constant 0 : i32
    %c0_i32_1 = arith.constant 0 : i32
    return %c0_i32, %c0_i32_0 : i32, i32
  }
  func.func @transform_12(%arg0: i32) -> (i32, i32) {
    %c0_i32 = arith.constant 0 : i32
    %c0_i32_0 = arith.constant 0 : i32
    %c0_i32_1 = arith.constant 0 : i32
    return %c0_i32, %c0_i32_0 : i32, i32
  }
  func.func @transform_13(%arg0: i32) -> (i32, i32) {
    %c0_i32 = arith.constant 0 : i32
    %c0_i32_0 = arith.constant 0 : i32
    %c0_i32_1 = arith.constant 0 : i32
    return %c0_i32, %c0_i32_0 : i32, i32
  }
  func.func @transform_14(%arg0: i32) -> (i32, i32) {
    %c0_i32 = arith.constant 0 : i32
    %c0_i32_0 = arith.constant 0 : i32
    return %arg0, %c0_i32 : i32, i32
  }
  func.func @transform_15(%arg0: i32) -> (i32, i32) {
    %c0_i32 = arith.constant 0 : i32
    %c0_i32_0 = arith.constant 0 : i32
    return %arg0, %c0_i32 : i32, i32
  }
  func.func @transform_16(%arg0: i32) -> (i32, i32) {
    %c0_i32 = arith.constant 0 : i32
    %c0_i32_0 = arith.constant 0 : i32
    return %arg0, %c0_i32 : i32, i32
  }
}

</mosaic_0001>

<llo_original>
// kernel: tpu_custom_call.1
$region0: #{tpu_custom_call.1}
  #allocation0 [shape = 'u32[]', space=smem, size = 0x4, offset = 0x4, fixed_abs, tag = 'smem constant byte address 0x4 - core index']
  #allocation1 [shape = 'u32[144,128]{1,0:T(1,128)}', space=vmem, size = 0x12000, scoped, tag = 'internal scratch']
  %s0 = inlined_call_operand.hbm [shape: bf16[64,128], index: 0, kind: input, shape index: {}]
  %s1 = inlined_call_operand.hbm [shape: bf16[64,512], index: 1, kind: input, shape index: {}]
  %s2 = inlined_call_operand.hbm [shape: bf16[128,128], index: 2, kind: input, shape index: {}]
  %s3 = inlined_call_operand.vmem [shape: f32[1,128], index: 3, kind: input, shape index: {}]
  %s4 = inlined_call_operand.hbm [shape: bf16[128,128], index: 4, kind: input, shape index: {}]
  %s5 = inlined_call_operand.vmem [shape: f32[1,128], index: 5, kind: input, shape index: {}]
  %s6 = inlined_call_operand.hbm [shape: bf16[128,256], index: 6, kind: input, shape index: {}]
  %s7 = inlined_call_operand.vmem [shape: f32[1,256], index: 7, kind: input, shape index: {}]
  %s8 = inlined_call_operand.hbm [shape: bf16[128,128], index: 8, kind: input, shape index: {}]
  %s9 = inlined_call_operand.vmem [shape: f32[1,128], index: 9, kind: input, shape index: {}]
  %s10 = inlined_call_operand.hbm [shape: bf16[128,128], index: 10, kind: input, shape index: {}]
  %s11 = inlined_call_operand.vmem [shape: f32[1,128], index: 11, kind: input, shape index: {}]
  %s12 = inlined_call_operand.hbm [shape: bf16[128,128], index: 12, kind: input, shape index: {}]
  %s13 = inlined_call_operand.vmem [shape: f32[1,128], index: 13, kind: input, shape index: {}]
  %s14 = inlined_call_operand.hbm [shape: f32[64,256], index: 14, kind: output, shape index: {0}]
  %s15 = inlined_call_operand.hbm [shape: f32[64,512], index: 15, kind: output, shape index: {1}]
  %s16 = inlined_call_operand.hbm [shape: bf16[64,512], index: 16, kind: output, shape index: {2}]
  %17 = xla_tuple %s14, %s15, %s16
  %s18 = sld [smem:[#allocation0]]
  $region137: #{tpu_custom_call.1} parent=0
    _
  %s20 = ssub.s32 1, %s18
  %s21 = scalar_select 0, %s20, %s18
  $region1: #{tpu_custom_call.1} parent=0
    #allocation2 [shape = 'u8[8192]{0}', space=vmem, size = 0x2000, scoped, tag = 'input window, operand 0']
    #allocation3 [shape = 's32[2]{0}', space=sflag, size = 0x8, scoped, tag = 'scoped memory for tpu_custom_call.1']
    #allocation4 [shape = 's32[2]{0}', space=sflag, size = 0x8, scoped, tag = 'scoped memory for tpu_custom_call.1']
    #allocation5 [shape = 'u8[32768]{0}', space=vmem, size = 0x8000, scoped, tag = 'input window, operand 1']
    #allocation6 [shape = 's32[2]{0}', space=sflag, size = 0x8, scoped, tag = 'scoped memory for tpu_custom_call.1']
    #allocation7 [shape = 'u8[32768]{0}', space=vmem, size = 0x8000, scoped, tag = 'input window, operand 2, single buffered']
    #allocation8 [shape = 'u8[32768]{0}', space=vmem, size = 0x8000, scoped, tag = 'input window, operand 4, single buffered']
    #allocation9 [shape = 's32[1]{0}', space=sflag, size = 0x4, scoped, tag = 'scoped memory for tpu_custom_call.1']
    #allocation10 [shape = 'u8[65536]{0}', space=vmem, size = 0x10000, scoped, tag = 'input window, operand 6, single buffered']
    #allocation11 [shape = 'u8[32768]{0}', space=vmem, size = 0x8000, scoped, tag = 'input window, operand 8, single buffered']
    #allocation12 [shape = 's32[1]{0}', space=sflag, size = 0x4, scoped, tag = 'scoped memory for tpu_custom_call.1']
    #allocation13 [shape = 'u8[32768]{0}', space=vmem, size = 0x8000, scoped, tag = 'input window, operand 10, single buffered']
    #allocation14 [shape = 'u8[32768]{0}', space=vmem, size = 0x8000, scoped, tag = 'input window, operand 12, single buffered']
    #allocation15 [shape = 's32[1]{0}', space=sflag, size = 0x4, scoped, tag = 'scoped memory for tpu_custom_call.1']
    #allocation16 [shape = 'u8[32768]{0}', space=vmem, size = 0x8000, scoped, tag = 'output window, operand 0']
    #allocation17 [shape = 'u8[65536]{0}', space=vmem, size = 0x10000, scoped, tag = 'output window, operand 1']
    #allocation18 [shape = 's32[2]{0}', space=sflag, size = 0x8, scoped, tag = 'scoped memory for tpu_custom_call.1']
    #allocation19 [shape = 'u8[32768]{0}', space=vmem, size = 0x8000, scoped, tag = 'output window, operand 2']
    %22 = vsyncpa [#allocation3], 0
    %s23 = scalar_lea.sflag [#allocation3], 1
    %24 = vsyncpa %s23, 0
    %25 = vsyncpa [#allocation6], 0
    %s26 = scalar_lea.sflag [#allocation6], 1
    %27 = vsyncpa %s26, 0
    %28 = vsyncpa [#allocation9], 0
    %29 = vsyncpa [#allocation12], 0
    %30 = vsyncpa [#allocation15], 0
    %31 = vsyncpa [#allocation4], 0
    %s32 = scalar_lea.sflag [#allocation4], 1
    %33 = vsyncpa %s32, 0
    %34 = vsyncpa [#allocation18], 0
    %s35 = scalar_lea.sflag [#allocation18], 1
    %36 = vsyncpa %s35, 0
    loop: start=0, step=1, limit=6
    $region2: #{tpu_custom_call.1} parent=1 // loop_pre_header
      _
    $region3: #{tpu_custom_call.1} parent=1 // loop_header
      %s38 = sphi 0, %s42
      %p39 = scmp.ge.s32.totalorder %s38, 6
      %s48 = sphi 0, %s50
      %s51 = sphi 0, %s48
      %s52 = sphi 0, %s51
      %s68 = sphi 0, %s52
      %s74 = sphi 0, %s76
      %s77 = sphi 0, %s74
      %s78 = sphi 0, %s77
      %s94 = sphi 0, %s78
      %s98 = sphi 0, %s98
      %s100 = sphi 0, %s98
      %s101 = sphi 0, %s100
      %s115 = sphi 0, %s101
      %s119 = sphi 0, %s119
      %s121 = sphi 0, %s119
      %s122 = sphi 0, %s121
      %s136 = sphi 0, %s122
      %s140 = sphi 0, %s140
      %s142 = sphi 0, %s140
      %s143 = sphi 0, %s142
      %s157 = sphi 0, %s143
      %s161 = sphi 0, %s161
      %s163 = sphi 0, %s161
      %s164 = sphi 0, %s163
      %s178 = sphi 0, %s164
      %s182 = sphi 0, %s182
      %s184 = sphi 0, %s182
      %s185 = sphi 0, %s184
      %s199 = sphi 0, %s185
      %s203 = sphi 0, %s203
      %s205 = sphi 0, %s203
      %s206 = sphi 0, %s205
      %s220 = sphi 0, %s206
      %s224 = sphi 0, %s224
      %s226 = sphi 0, %s224
      %s227 = sphi 0, %s226
      %s241 = sphi 0, %s227
      %s245 = sphi 0, %s245
      %s247 = sphi 0, %s245
      %s248 = sphi 0, %s247
      %s262 = sphi 0, %s248
      %s266 = sphi 0, %s266
      %s268 = sphi 0, %s266
      %s269 = sphi 0, %s268
      %s283 = sphi 0, %s269
      %s287 = sphi 0, %s287
      %s289 = sphi 0, %s287
      %s290 = sphi 0, %s289
      %s304 = sphi 0, %s290
      %s308 = sphi 0, %s308
      %s310 = sphi 0, %s308
      %s311 = sphi 0, %s310
      %s325 = sphi 0, %s311
      %s329 = sphi 0, %s329
      %s331 = sphi 0, %s329
      %s332 = sphi 0, %s331
      %s346 = sphi 0, %s332
      %s352 = sphi 0, %s354
      %s355 = sphi 0, %s352
      %s356 = sphi 0, %s355
      %s372 = sphi 0, %s356
      %s378 = sphi 0, %s380
      %s381 = sphi 0, %s378
      %s382 = sphi 0, %s381
      %s398 = sphi 0, %s382
      %s404 = sphi 0, %s406
      %s407 = sphi 0, %s404
      %s408 = sphi 0, %s407
      %s424 = sphi 0, %s408
    $region4: #{tpu_custom_call.1} parent=1 // loop_header_branch
      %41 = sbr.rel (%p39) target = $region8
    $region5: #{tpu_custom_call.1} parent=1 // loop_body
      %s43 = ssub.s32 %s38, 1
      %s44 = ssub.s32 %s38, 2
      %s45 = sadd.s32 %s38, 1
      %s46 = ssub.s32 %s38, %s45
      %p47 = scmp.eq.s32.totalorder %s46, 0
      %s49 = sadd.s32 %s48, 1
      %s50 = scalar_select %p47, %s48, %s49
      %p53 = pneg %p47
      %p54 = scmp.eq.s32.totalorder %s38, 3
      %p55 = por %p53, %p54
      %p56 = scmp.ne.s32.totalorder %s48, %s51
      %p57 = scmp.eq.s32.totalorder %s38, 0
      %p58 = por %p56, %p57
      %p59 = scmp.ne.s32.totalorder %s48, %s51
      %p60 = scmp.eq.s32.totalorder %s43, 3
      %p61 = por %p59, %p60
      %p62 = scmp.ne.s32.totalorder %s51, %s52
      %p63 = scmp.eq.s32.totalorder %s43, 0
      %p64 = por %p62, %p63
      %p65 = scmp.ne.s32.totalorder %s51, %s52
      %p66 = scmp.eq.s32.totalorder %s44, 3
      %p67 = por %p65, %p66
      %p69 = scmp.ne.s32.totalorder %s52, %s68
      %p70 = scmp.eq.s32.totalorder %s44, 0
      %p71 = por %p69, %p70
      %s72 = ssub.s32 %s38, %s45
      %p73 = scmp.eq.s32.totalorder %s72, 0
      %s75 = sadd.s32 %s74, 1
      %s76 = scalar_select %p73, %s74, %s75
      %p79 = pneg %p73
      %p80 = scmp.eq.s32.totalorder %s38, 3
      %p81 = por %p79, %p80
      %p82 = scmp.ne.s32.totalorder %s74, %s77
      %p83 = scmp.eq.s32.totalorder %s38, 0
      %p84 = por %p82, %p83
      %p85 = scmp.ne.s32.totalorder %s74, %s77
      %p86 = scmp.eq.s32.totalorder %s43, 3
      %p87 = por %p85, %p86
      %p88 = scmp.ne.s32.totalorder %s77, %s78
      %p89 = scmp.eq.s32.totalorder %s43, 0
      %p90 = por %p88, %p89
      %p91 = scmp.ne.s32.totalorder %s77, %s78
      %p92 = scmp.eq.s32.totalorder %s44, 3
      %p93 = por %p91, %p92
      %p95 = scmp.ne.s32.totalorder %s78, %s94
      %p96 = scmp.eq.s32.totalorder %s44, 0
      %p97 = por %p95, %p96
      %s99 = sadd.s32 %s98, 1
      %p102 = scmp.eq.s32.totalorder %s38, 3
      %p103 = scmp.ne.s32.totalorder %s98, %s100
      %p104 = scmp.eq.s32.totalorder %s38, 0
      %p105 = por %p103, %p104
      %p106 = scmp.ne.s32.totalorder %s98, %s100
      %p107 = scmp.eq.s32.totalorder %s43, 3
      %p108 = por %p106, %p107
      %p109 = scmp.ne.s32.totalorder %s100, %s101
      %p110 = scmp.eq.s32.totalorder %s43, 0
      %p111 = por %p109, %p110
      %p112 = scmp.ne.s32.totalorder %s100, %s101
      %p113 = scmp.eq.s32.totalorder %s44, 3
      %p114 = por %p112, %p113
      %p116 = scmp.ne.s32.totalorder %s101, %s115
      %p117 = scmp.eq.s32.totalorder %s44, 0
      %p118 = por %p116, %p117
      %s120 = sadd.s32 %s119, 1
      %p123 = scmp.eq.s32.totalorder %s38, 3
      %p124 = scmp.ne.s32.totalorder %s119, %s121
      %p125 = scmp.eq.s32.totalorder %s38, 0
      %p126 = por %p124, %p125
      %p127 = scmp.ne.s32.totalorder %s119, %s121
      %p128 = scmp.eq.s32.totalorder %s43, 3
      %p129 = por %p127, %p128
      %p130 = scmp.ne.s32.totalorder %s121, %s122
      %p131 = scmp.eq.s32.totalorder %s43, 0
      %p132 = por %p130, %p131
      %p133 = scmp.ne.s32.totalorder %s121, %s122
      %p134 = scmp.eq.s32.totalorder %s44, 3
      %p135 = por %p133, %p134
      %p137 = scmp.ne.s32.totalorder %s122, %s136
      %p138 = scmp.eq.s32.totalorder %s44, 0
      %p139 = por %p137, %p138
      %s141 = sadd.s32 %s140, 1
      %p144 = scmp.eq.s32.totalorder %s38, 3
      %p145 = scmp.ne.s32.totalorder %s140, %s142
      %p146 = scmp.eq.s32.totalorder %s38, 0
      %p147 = por %p145, %p146
      %p148 = scmp.ne.s32.totalorder %s140, %s142
      %p149 = scmp.eq.s32.totalorder %s43, 3
      %p150 = por %p148, %p149
      %p151 = scmp.ne.s32.totalorder %s142, %s143
      %p152 = scmp.eq.s32.totalorder %s43, 0
      %p153 = por %p151, %p152
      %p154 = scmp.ne.s32.totalorder %s142, %s143
      %p155 = scmp.eq.s32.totalorder %s44, 3
      %p156 = por %p154, %p155
      %p158 = scmp.ne.s32.totalorder %s143, %s157
      %p159 = scmp.eq.s32.totalorder %s44, 0
      %p160 = por %p158, %p159
      %s162 = sadd.s32 %s161, 1
      %p165 = scmp.eq.s32.totalorder %s38, 3
      %p166 = scmp.ne.s32.totalorder %s161, %s163
      %p167 = scmp.eq.s32.totalorder %s38, 0
      %p168 = por %p166, %p167
      %p169 = scmp.ne.s32.totalorder %s161, %s163
      %p170 = scmp.eq.s32.totalorder %s43, 3
      %p171 = por %p169, %p170
      %p172 = scmp.ne.s32.totalorder %s163, %s164
      %p173 = scmp.eq.s32.totalorder %s43, 0
      %p174 = por %p172, %p173
      %p175 = scmp.ne.s32.totalorder %s163, %s164
      %p176 = scmp.eq.s32.totalorder %s44, 3
      %p177 = por %p175, %p176
      %p179 = scmp.ne.s32.totalorder %s164, %s178
      %p180 = scmp.eq.s32.totalorder %s44, 0
      %p181 = por %p179, %p180
      %s183 = sadd.s32 %s182, 1
      %p186 = scmp.eq.s32.totalorder %s38, 3
      %p187 = scmp.ne.s32.totalorder %s182, %s184
      %p188 = scmp.eq.s32.totalorder %s38, 0
      %p189 = por %p187, %p188
      %p190 = scmp.ne.s32.totalorder %s182, %s184
      %p191 = scmp.eq.s32.totalorder %s43, 3
      %p192 = por %p190, %p191
      %p193 = scmp.ne.s32.totalorder %s184, %s185
      %p194 = scmp.eq.s32.totalorder %s43, 0
      %p195 = por %p193, %p194
      %p196 = scmp.ne.s32.totalorder %s184, %s185
      %p197 = scmp.eq.s32.totalorder %s44, 3
      %p198 = por %p196, %p197
      %p200 = scmp.ne.s32.totalorder %s185, %s199
      %p201 = scmp.eq.s32.totalorder %s44, 0
      %p202 = por %p200, %p201
      %s204 = sadd.s32 %s203, 1
      %p207 = scmp.eq.s32.totalorder %s38, 3
      %p208 = scmp.ne.s32.totalorder %s203, %s205
      %p209 = scmp.eq.s32.totalorder %s38, 0
      %p210 = por %p208, %p209
      %p211 = scmp.ne.s32.totalorder %s203, %s205
      %p212 = scmp.eq.s32.totalorder %s43, 3
      %p213 = por %p211, %p212
      %p214 = scmp.ne.s32.totalorder %s205, %s206
      %p215 = scmp.eq.s32.totalorder %s43, 0
      %p216 = por %p214, %p215
      %p217 = scmp.ne.s32.totalorder %s205, %s206
      %p218 = scmp.eq.s32.totalorder %s44, 3
      %p219 = por %p217, %p218
      %p221 = scmp.ne.s32.totalorder %s206, %s220
      %p222 = scmp.eq.s32.totalorder %s44, 0
      %p223 = por %p221, %p222
      %s225 = sadd.s32 %s224, 1
      %p228 = scmp.eq.s32.totalorder %s38, 3
      %p229 = scmp.ne.s32.totalorder %s224, %s226
      %p230 = scmp.eq.s32.totalorder %s38, 0
      %p231 = por %p229, %p230
      %p232 = scmp.ne.s32.totalorder %s224, %s226
      %p233 = scmp.eq.s32.totalorder %s43, 3
      %p234 = por %p232, %p233
      %p235 = scmp.ne.s32.totalorder %s226, %s227
      %p236 = scmp.eq.s32.totalorder %s43, 0
      %p237 = por %p235, %p236
      %p238 = scmp.ne.s32.totalorder %s226, %s227
      %p239 = scmp.eq.s32.totalorder %s44, 3
      %p240 = por %p238, %p239
      %p242 = scmp.ne.s32.totalorder %s227, %s241
      %p243 = scmp.eq.s32.totalorder %s44, 0
      %p244 = por %p242, %p243
      %s246 = sadd.s32 %s245, 1
      %p249 = scmp.eq.s32.totalorder %s38, 3
      %p250 = scmp.ne.s32.totalorder %s245, %s247
      %p251 = scmp.eq.s32.totalorder %s38, 0
      %p252 = por %p250, %p251
      %p253 = scmp.ne.s32.totalorder %s245, %s247
      %p254 = scmp.eq.s32.totalorder %s43, 3
      %p255 = por %p253, %p254
      %p256 = scmp.ne.s32.totalorder %s247, %s248
      %p257 = scmp.eq.s32.totalorder %s43, 0
      %p258 = por %p256, %p257
      %p259 = scmp.ne.s32.totalorder %s247, %s248
      %p260 = scmp.eq.s32.totalorder %s44, 3
      %p261 = por %p259, %p260
      %p263 = scmp.ne.s32.totalorder %s248, %s262
      %p264 = scmp.eq.s32.totalorder %s44, 0
      %p265 = por %p263, %p264
      %s267 = sadd.s32 %s266, 1
      %p270 = scmp.eq.s32.totalorder %s38, 3
      %p271 = scmp.ne.s32.totalorder %s266, %s268
      %p272 = scmp.eq.s32.totalorder %s38, 0
      %p273 = por %p271, %p272
      %p274 = scmp.ne.s32.totalorder %s266, %s268
      %p275 = scmp.eq.s32.totalorder %s43, 3
      %p276 = por %p274, %p275
      %p277 = scmp.ne.s32.totalorder %s268, %s269
      %p278 = scmp.eq.s32.totalorder %s43, 0
      %p279 = por %p277, %p278
      %p280 = scmp.ne.s32.totalorder %s268, %s269
      %p281 = scmp.eq.s32.totalorder %s44, 3
      %p282 = por %p280, %p281
      %p284 = scmp.ne.s32.totalorder %s269, %s283
      %p285 = scmp.eq.s32.totalorder %s44, 0
      %p286 = por %p284, %p285
      %s288 = sadd.s32 %s287, 1
      %p291 = scmp.eq.s32.totalorder %s38, 3
      %p292 = scmp.ne.s32.totalorder %s287, %s289
      %p293 = scmp.eq.s32.totalorder %s38, 0
      %p294 = por %p292, %p293
      %p295 = scmp.ne.s32.totalorder %s287, %s289
      %p296 = scmp.eq.s32.totalorder %s43, 3
      %p297 = por %p295, %p296
      %p298 = scmp.ne.s32.totalorder %s289, %s290
      %p299 = scmp.eq.s32.totalorder %s43, 0
      %p300 = por %p298, %p299
      %p301 = scmp.ne.s32.totalorder %s289, %s290
      %p302 = scmp.eq.s32.totalorder %s44, 3
      %p303 = por %p301, %p302
      %p305 = scmp.ne.s32.totalorder %s290, %s304
      %p306 = scmp.eq.s32.totalorder %s44, 0
      %p307 = por %p305, %p306
      %s309 = sadd.s32 %s308, 1
      %p312 = scmp.eq.s32.totalorder %s38, 3
      %p313 = scmp.ne.s32.totalorder %s308, %s310
      %p314 = scmp.eq.s32.totalorder %s38, 0
      %p315 = por %p313, %p314
      %p316 = scmp.ne.s32.totalorder %s308, %s310
      %p317 = scmp.eq.s32.totalorder %s43, 3
      %p318 = por %p316, %p317
      %p319 = scmp.ne.s32.totalorder %s310, %s311
      %p320 = scmp.eq.s32.totalorder %s43, 0
      %p321 = por %p319, %p320
      %p322 = scmp.ne.s32.totalorder %s310, %s311
      %p323 = scmp.eq.s32.totalorder %s44, 3
      %p324 = por %p322, %p323
      %p326 = scmp.ne.s32.totalorder %s311, %s325
      %p327 = scmp.eq.s32.totalorder %s44, 0
      %p328 = por %p326, %p327
      %s330 = sadd.s32 %s329, 1
      %p333 = scmp.eq.s32.totalorder %s38, 3
      %p334 = scmp.ne.s32.totalorder %s329, %s331
      %p335 = scmp.eq.s32.totalorder %s38, 0
      %p336 = por %p334, %p335
      %p337 = scmp.ne.s32.totalorder %s329, %s331
      %p338 = scmp.eq.s32.totalorder %s43, 3
      %p339 = por %p337, %p338
      %p340 = scmp.ne.s32.totalorder %s331, %s332
      %p341 = scmp.eq.s32.totalorder %s43, 0
      %p342 = por %p340, %p341
      %p343 = scmp.ne.s32.totalorder %s331, %s332
      %p344 = scmp.eq.s32.totalorder %s44, 3
      %p345 = por %p343, %p344
      %p347 = scmp.ne.s32.totalorder %s332, %s346
      %p348 = scmp.eq.s32.totalorder %s44, 0
      %p349 = por %p347, %p348
      %s350 = ssub.s32 %s38, %s45
      %p351 = scmp.eq.s32.totalorder %s350, 0
      %s353 = sadd.s32 %s352, 1
      %s354 = scalar_select %p351, %s352, %s353
      %p357 = pneg %p351
      %p358 = scmp.eq.s32.totalorder %s38, 3
      %p359 = por %p357, %p358
      %p360 = scmp.ne.s32.totalorder %s352, %s355
      %p361 = scmp.eq.s32.totalorder %s38, 0
      %p362 = por %p360, %p361
      %p363 = scmp.ne.s32.totalorder %s352, %s355
      %p364 = scmp.eq.s32.totalorder %s43, 3
      %p365 = por %p363, %p364
      %p366 = scmp.ne.s32.totalorder %s355, %s356
      %p367 = scmp.eq.s32.totalorder %s43, 0
      %p368 = por %p366, %p367
      %p369 = scmp.ne.s32.totalorder %s355, %s356
      %p370 = scmp.eq.s32.totalorder %s44, 3
      %p371 = por %p369, %p370
      %p373 = scmp.ne.s32.totalorder %s356, %s372
      %p374 = scmp.eq.s32.totalorder %s44, 0
      %p375 = por %p373, %p374
      %s376 = ssub.s32 %s38, %s45
      %p377 = scmp.eq.s32.totalorder %s376, 0
      %s379 = sadd.s32 %s378, 1
      %s380 = scalar_select %p377, %s378, %s379
      %p383 = pneg %p377
      %p384 = scmp.eq.s32.totalorder %s38, 3
      %p385 = por %p383, %p384
      %p386 = scmp.ne.s32.totalorder %s378, %s381
      %p387 = scmp.eq.s32.totalorder %s38, 0
      %p388 = por %p386, %p387
      %p389 = scmp.ne.s32.totalorder %s378, %s381
      %p390 = scmp.eq.s32.totalorder %s43, 3
      %p391 = por %p389, %p390
      %p392 = scmp.ne.s32.totalorder %s381, %s382
      %p393 = scmp.eq.s32.totalorder %s43, 0
      %p394 = por %p392, %p393
      %p395 = scmp.ne.s32.totalorder %s381, %s382
      %p396 = scmp.eq.s32.totalorder %s44, 3
      %p397 = por %p395, %p396
      %p399 = scmp.ne.s32.totalorder %s382, %s398
      %p400 = scmp.eq.s32.totalorder %s44, 0
      %p401 = por %p399, %p400
      %s402 = ssub.s32 %s38, %s45
      %p403 = scmp.eq.s32.totalorder %s402, 0
      %s405 = sadd.s32 %s404, 1
      %s406 = scalar_select %p403, %s404, %s405
      %p409 = pneg %p403
      %p410 = scmp.eq.s32.totalorder %s38, 3
      %p411 = por %p409, %p410
      %p412 = scmp.ne.s32.totalorder %s404, %s407
      %p413 = scmp.eq.s32.totalorder %s38, 0
      %p414 = por %p412, %p413
      %p415 = scmp.ne.s32.totalorder %s404, %s407
      %p416 = scmp.eq.s32.totalorder %s43, 3
      %p417 = por %p415, %p416
      %p418 = scmp.ne.s32.totalorder %s407, %s408
      %p419 = scmp.eq.s32.totalorder %s43, 0
      %p420 = por %p418, %p419
      %p421 = scmp.ne.s32.totalorder %s407, %s408
      %p422 = scmp.eq.s32.totalorder %s44, 3
      %p423 = por %p421, %p422
      %p425 = scmp.ne.s32.totalorder %s408, %s424
      %p426 = scmp.eq.s32.totalorder %s44, 0
      %p427 = por %p425, %p426
      %p428 = scmp.le.s32.totalorder 1, %s38
      %p429 = scmp.lt.s32.totalorder %s38, 5
      %p430 = pnand %p428, %p429
      %p431 = pneg %p430
      // Predicated region
      $region9: #{tpu_custom_call.1} parent=5 // pred_check
        _
      $region10: #{tpu_custom_call.1} parent=5 // pred_check_branch
        %433 = sbr.rel (%p430) target = $region12
      $region11: #{tpu_custom_call.1} parent=5 // pred_region
        %s434 = ssub.s32 %s38, 1
        // Predicated region
        $region13: #{tpu_custom_call.1} parent=11 // pred_check
          %p435 = pneg %p111
        $region14: #{tpu_custom_call.1} parent=11 // pred_check_branch
          %437 = sbr.rel (%p435) target = $region16
        $region15: #{tpu_custom_call.1} parent=11 // pred_region
          %s439 = ssub.s32 1024, 1024
          %440 = vsyncadd [#allocation6], %s439
          %s441 = sshll.u32 [#allocation7], 4
          %s442 = int_to_ptr.vmem [resolvable:$true] %s441
          %447 = dma.hbm_to_vmem [thread:$0]  %s2, 1024, %s442, [#allocation6], 64, 64, 4
        $region16: #{tpu_custom_call.1} parent=11 // pred_fallthru
          _
        // Predicated region
        $region17: #{tpu_custom_call.1} parent=11 // pred_check
          %p448 = pneg %p132
        $region18: #{tpu_custom_call.1} parent=11 // pred_check_branch
          %450 = sbr.rel (%p448) target = $region20
        $region19: #{tpu_custom_call.1} parent=11 // pred_region
          _
        $region20: #{tpu_custom_call.1} parent=11 // pred_fallthru
          _
        // Predicated region
        $region21: #{tpu_custom_call.1} parent=11 // pred_check
          %p451 = pneg %p153
        $region22: #{tpu_custom_call.1} parent=11 // pred_check_branch
          %453 = sbr.rel (%p451) target = $region24
        $region23: #{tpu_custom_call.1} parent=11 // pred_region
          %s455 = ssub.s32 1024, 1024
          %456 = vsyncadd [#allocation9], %s455
          %s457 = sshll.u32 [#allocation8], 4
          %s458 = int_to_ptr.vmem [resolvable:$true] %s457
          %463 = dma.hbm_to_vmem [thread:$0]  %s4, 1024, %s458, [#allocation9], 64, 64, 4
        $region24: #{tpu_custom_call.1} parent=11 // pred_fallthru
          _
        // Predicated region
        $region25: #{tpu_custom_call.1} parent=11 // pred_check
          %p464 = pneg %p174
        $region26: #{tpu_custom_call.1} parent=11 // pred_check_branch
          %466 = sbr.rel (%p464) target = $region28
        $region27: #{tpu_custom_call.1} parent=11 // pred_region
          _
        $region28: #{tpu_custom_call.1} parent=11 // pred_fallthru
          _
        // Predicated region
        $region29: #{tpu_custom_call.1} parent=11 // pred_check
          %p467 = pneg %p195
        $region30: #{tpu_custom_call.1} parent=11 // pred_check_branch
          %469 = sbr.rel (%p467) target = $region32
        $region31: #{tpu_custom_call.1} parent=11 // pred_region
          %s471 = ssub.s32 2048, 2048
          %472 = vsyncadd [#allocation9], %s471
          %s473 = sshll.u32 [#allocation10], 4
          %s474 = int_to_ptr.vmem [resolvable:$true] %s473
          %479 = dma.hbm_to_vmem [thread:$0]  %s6, 2048, %s474, [#allocation9], 128, 128, 8
        $region32: #{tpu_custom_call.1} parent=11 // pred_fallthru
          _
        // Predicated region
        $region33: #{tpu_custom_call.1} parent=11 // pred_check
          %p480 = pneg %p216
        $region34: #{tpu_custom_call.1} parent=11 // pred_check_branch
          %482 = sbr.rel (%p480) target = $region36
        $region35: #{tpu_custom_call.1} parent=11 // pred_region
          _
        $region36: #{tpu_custom_call.1} parent=11 // pred_fallthru
          _
        // Predicated region
        $region37: #{tpu_custom_call.1} parent=11 // pred_check
          %p483 = pneg %p237
        $region38: #{tpu_custom_call.1} parent=11 // pred_check_branch
          %485 = sbr.rel (%p483) target = $region40
        $region39: #{tpu_custom_call.1} parent=11 // pred_region
          %s487 = ssub.s32 1024, 1024
          %488 = vsyncadd [#allocation12], %s487
          %s489 = sshll.u32 [#allocation11], 4
          %s490 = int_to_ptr.vmem [resolvable:$true] %s489
          %495 = dma.hbm_to_vmem [thread:$0]  %s8, 1024, %s490, [#allocation12], 64, 64, 4
        $region40: #{tpu_custom_call.1} parent=11 // pred_fallthru
          _
        // Predicated region
        $region41: #{tpu_custom_call.1} parent=11 // pred_check
          %p496 = pneg %p258
        $region42: #{tpu_custom_call.1} parent=11 // pred_check_branch
          %498 = sbr.rel (%p496) target = $region44
        $region43: #{tpu_custom_call.1} parent=11 // pred_region
          _
        $region44: #{tpu_custom_call.1} parent=11 // pred_fallthru
          _
        // Predicated region
        $region45: #{tpu_custom_call.1} parent=11 // pred_check
          %p499 = pneg %p279
        $region46: #{tpu_custom_call.1} parent=11 // pred_check_branch
          %501 = sbr.rel (%p499) target = $region48
        $region47: #{tpu_custom_call.1} parent=11 // pred_region
          %s503 = ssub.s32 1024, 1024
          %504 = vsyncadd [#allocation12], %s503
          %s505 = sshll.u32 [#allocation13], 4
          %s506 = int_to_ptr.vmem [resolvable:$true] %s505
          %511 = dma.hbm_to_vmem [thread:$0]  %s10, 1024, %s506, [#allocation12], 64, 64, 4
        $region48: #{tpu_custom_call.1} parent=11 // pred_fallthru
          _
        // Predicated region
        $region49: #{tpu_custom_call.1} parent=11 // pred_check
          %p512 = pneg %p300
        $region50: #{tpu_custom_call.1} parent=11 // pred_check_branch
          %514 = sbr.rel (%p512) target = $region52
        $region51: #{tpu_custom_call.1} parent=11 // pred_region
          _
        $region52: #{tpu_custom_call.1} parent=11 // pred_fallthru
          _
        // Predicated region
        $region53: #{tpu_custom_call.1} parent=11 // pred_check
          %p515 = pneg %p321
        $region54: #{tpu_custom_call.1} parent=11 // pred_check_branch
          %517 = sbr.rel (%p515) target = $region56
        $region55: #{tpu_custom_call.1} parent=11 // pred_region
          %s519 = ssub.s32 1024, 1024
          %520 = vsyncadd [#allocation15], %s519
          %s521 = sshll.u32 [#allocation14], 4
          %s522 = int_to_ptr.vmem [resolvable:$true] %s521
          %527 = dma.hbm_to_vmem [thread:$0]  %s12, 1024, %s522, [#allocation15], 64, 64, 4
        $region56: #{tpu_custom_call.1} parent=11 // pred_fallthru
          _
        // Predicated region
        $region57: #{tpu_custom_call.1} parent=11 // pred_check
          %p528 = pneg %p342
        $region58: #{tpu_custom_call.1} parent=11 // pred_check_branch
          %530 = sbr.rel (%p528) target = $region60
        $region59: #{tpu_custom_call.1} parent=11 // pred_region
          _
        $region60: #{tpu_custom_call.1} parent=11 // pred_fallthru
          _
      $region12: #{tpu_custom_call.1} parent=5 // pred_fallthru
        _
      %p531 = scmp.lt.s32.totalorder %s38, 4
      // Predicated region
      $region61: #{tpu_custom_call.1} parent=5 // pred_check
        %p532 = pneg %p531
      $region62: #{tpu_custom_call.1} parent=5 // pred_check_branch
        %534 = sbr.rel (%p532) target = $region64
      $region63: #{tpu_custom_call.1} parent=5 // pred_region
        // Predicated region
        $region65: #{tpu_custom_call.1} parent=63 // pred_check
          %p535 = pneg %p58
        $region66: #{tpu_custom_call.1} parent=63 // pred_check_branch
          %537 = sbr.rel (%p535) target = $region68
        $region67: #{tpu_custom_call.1} parent=63 // pred_region
          %s538 = sand.u32 %s48, 1
          %s539 = scalar_lea.sflag [#allocation3], %s538
          %s540 = sand.u32 %s48, 1
          %s541 = smul.addr %s540, 8
          %s542 = scalar_lea.vmem [#allocation2], %s541
          %s543 = smul.u32 2, %s38
          %s545 = ssub.s32 128, 128
          %546 = vsyncadd %s539, %s545
          %s547 = smul.addr %s543, 64
          %s548 = scalar_lea.hbm %s0, %s547
          %s549 = sshll.u32 %s542, 4
          %s550 = int_to_ptr.vmem [resolvable:$true] %s549
          %555 = dma.hbm_to_vmem [thread:$0]  %s548, 128, %s550, %s539, 64, 64, 4
        $region68: #{tpu_custom_call.1} parent=63 // pred_fallthru
          _
        // Predicated region
        $region69: #{tpu_custom_call.1} parent=63 // pred_check
          %p556 = pneg %p84
        $region70: #{tpu_custom_call.1} parent=63 // pred_check_branch
          %558 = sbr.rel (%p556) target = $region72
        $region71: #{tpu_custom_call.1} parent=63 // pred_region
          %s559 = sand.u32 %s38, 1
          %s560 = scalar_lea.sflag [#allocation6], %s559
          %s561 = sand.u32 %s74, 1
          %s562 = smul.addr %s561, 32
          %s563 = scalar_lea.vmem [#allocation5], %s562
          %s564 = smul.u32 2, %s38
          %s566 = ssub.s32 512, 512
          %567 = vsyncadd %s560, %s566
          %s568 = smul.addr %s564, 4
          %s569 = smul.addr %s568, 64
          %s570 = scalar_lea.hbm %s1, %s569
          %s571 = sshll.u32 %s563, 4
          %s572 = int_to_ptr.vmem [resolvable:$true] %s571
          %577 = dma.hbm_to_vmem [thread:$0]  %s570, 512, %s572, %s560, 256, 256, 16
        $region72: #{tpu_custom_call.1} parent=63 // pred_fallthru
          _
      $region64: #{tpu_custom_call.1} parent=5 // pred_fallthru
        _
      %p578 = scmp.le.s32.totalorder 1, %s38
      %p579 = scmp.lt.s32.totalorder %s38, 5
      %p580 = pnand %p578, %p579
      %p581 = pneg %p580
      // Predicated region
      $region73: #{tpu_custom_call.1} parent=5 // pred_check
        _
      $region74: #{tpu_custom_call.1} parent=5 // pred_check_branch
        %583 = sbr.rel (%p580) target = $region76
      $region75: #{tpu_custom_call.1} parent=5 // pred_region
        %s584 = ssub.s32 %s38, 1
        %s585 = sand.u32 %s51, 1
        %s586 = scalar_lea.sflag [#allocation3], %s585
        %s587 = sand.u32 %s51, 1
        %s588 = smul.addr %s587, 8
        %s589 = scalar_lea.vmem [#allocation2], %s588
        // Predicated region
        $region77: #{tpu_custom_call.1} parent=75 // pred_check
          %p590 = pneg %p64
        $region78: #{tpu_custom_call.1} parent=75 // pred_check_branch
          %592 = sbr.rel (%p590) target = $region80
        $region79: #{tpu_custom_call.1} parent=75 // pred_region
          %593 = dma.done %s586, 128
        $region80: #{tpu_custom_call.1} parent=75 // pred_fallthru
          _
        %s594 = sand.u32 %s43, 1
        %s595 = scalar_lea.sflag [#allocation6], %s594
        %s596 = sand.u32 %s77, 1
        %s597 = smul.addr %s596, 32
        %s598 = scalar_lea.vmem [#allocation5], %s597
        // Predicated region
        $region81: #{tpu_custom_call.1} parent=75 // pred_check
          %p599 = pneg %p90
        $region82: #{tpu_custom_call.1} parent=75 // pred_check_branch
          %601 = sbr.rel (%p599) target = $region84
        $region83: #{tpu_custom_call.1} parent=75 // pred_region
          %602 = dma.done %s595, 512
        $region84: #{tpu_custom_call.1} parent=75 // pred_fallthru
          _
        // Predicated region
        $region85: #{tpu_custom_call.1} parent=75 // pred_check
          %p603 = pneg %p111
        $region86: #{tpu_custom_call.1} parent=75 // pred_check_branch
          %605 = sbr.rel (%p603) target = $region88
        $region87: #{tpu_custom_call.1} parent=75 // pred_region
          %606 = dma.done [#allocation6], 1024
        $region88: #{tpu_custom_call.1} parent=75 // pred_fallthru
          _
        // Predicated region
        $region89: #{tpu_custom_call.1} parent=75 // pred_check
          %p607 = pneg %p153
        $region90: #{tpu_custom_call.1} parent=75 // pred_check_branch
          %609 = sbr.rel (%p607) target = $region92
        $region91: #{tpu_custom_call.1} parent=75 // pred_region
          %610 = dma.done [#allocation9], 1024
        $region92: #{tpu_custom_call.1} parent=75 // pred_fallthru
          _
        // Predicated region
        $region93: #{tpu_custom_call.1} parent=75 // pred_check
          %p611 = pneg %p195
        $region94: #{tpu_custom_call.1} parent=75 // pred_check_branch
          %613 = sbr.rel (%p611) target = $region96
        $region95: #{tpu_custom_call.1} parent=75 // pred_region
          %614 = dma.done [#allocation9], 2048
        $region96: #{tpu_custom_call.1} parent=75 // pred_fallthru
          _
        // Predicated region
        $region97: #{tpu_custom_call.1} parent=75 // pred_check
          %p615 = pneg %p237
        $region98: #{tpu_custom_call.1} parent=75 // pred_check_branch
          %617 = sbr.rel (%p615) target = $region100
        $region99: #{tpu_custom_call.1} parent=75 // pred_region
          %618 = dma.done [#allocation12], 1024
        $region100: #{tpu_custom_call.1} parent=75 // pred_fallthru
          _
        // Predicated region
        $region101: #{tpu_custom_call.1} parent=75 // pred_check
          %p619 = pneg %p279
        $region102: #{tpu_custom_call.1} parent=75 // pred_check_branch
          %621 = sbr.rel (%p619) target = $region104
        $region103: #{tpu_custom_call.1} parent=75 // pred_region
          %622 = dma.done [#allocation12], 1024
        $region104: #{tpu_custom_call.1} parent=75 // pred_fallthru
          _
        // Predicated region
        $region105: #{tpu_custom_call.1} parent=75 // pred_check
          %p623 = pneg %p321
        $region106: #{tpu_custom_call.1} parent=75 // pred_check_branch
          %625 = sbr.rel (%p623) target = $region108
        $region107: #{tpu_custom_call.1} parent=75 // pred_region
          %626 = dma.done [#allocation15], 1024
        $region108: #{tpu_custom_call.1} parent=75 // pred_fallthru
          _
        %s627 = sand.u32 %s51, 1
        %s628 = scalar_lea.sflag [#allocation3], %s627
        %s629 = sand.u32 %s51, 1
        %s630 = smul.addr %s629, 8
        %s631 = scalar_lea.vmem [#allocation2], %s630
        %p632 = pneg %p64
        %p633 = pneg %p61
        %s634 = sand.u32 %s43, 1
        %s635 = scalar_lea.sflag [#allocation6], %s634
        %s636 = sand.u32 %s77, 1
        %s637 = smul.addr %s636, 32
        %s638 = scalar_lea.vmem [#allocation5], %s637
        %p639 = pneg %p90
        %p640 = pneg %p87
        %p641 = pneg %p111
        %p642 = pneg %p108
        %p643 = pneg %p132
        %p644 = pneg %p129
        %p645 = pneg %p153
        %p646 = pneg %p150
        %p647 = pneg %p174
        %p648 = pneg %p171
        %p649 = pneg %p195
        %p650 = pneg %p192
        %p651 = pneg %p216
        %p652 = pneg %p213
        %p653 = pneg %p237
        %p654 = pneg %p234
        %p655 = pneg %p258
        %p656 = pneg %p255
        %p657 = pneg %p279
        %p658 = pneg %p276
        %p659 = pneg %p300
        %p660 = pneg %p297
        %p661 = pneg %p321
        %p662 = pneg %p318
        %p663 = pneg %p342
        %p664 = pneg %p339
        %p665 = pneg %p368
        %p666 = pneg %p365
        %s667 = sand.u32 %s355, 1
        %s668 = scalar_lea.sflag [#allocation4], %s667
        %s669 = sand.u32 %s355, 1
        %s670 = smul.addr %s669, 32
        %s671 = scalar_lea.vmem [#allocation16], %s670
        %p672 = pneg %p394
        %p673 = pneg %p391
        %s674 = sand.u32 %s43, 1
        %s675 = scalar_lea.sflag [#allocation18], %s674
        %s676 = sand.u32 %s381, 1
        %s677 = smul.addr %s676, 64
        %s678 = scalar_lea.vmem [#allocation17], %s677
        %p679 = pneg %p420
        %p680 = pneg %p417
        %s681 = sand.u32 %s43, 1
        %s682 = scalar_lea.sflag [#allocation18], %s681
        %s683 = sand.u32 %s407, 1
        %s684 = smul.addr %s683, 32
        %s685 = scalar_lea.vmem [#allocation19], %s684
        %s686 = smul.u32 2, %s43
        %s687 = smul.u32 2, %s43
        %s688 = smul.u32 2, %s43
        %s689 = smul.u32 2, %s43
        %s690 = smul.u32 2, %s43
        %v692 = vld [vmem:[%s589] sm:$0xf]
        %v693 = vld [vmem:[%s589 + $0x4] sm:$0xf]
        %v694 = vld [vmem:[#allocation7] sm:$0xf]
        %v695 = vld [vmem:[#allocation7 + $0x4] sm:$0xf]
        %v696 = vld [vmem:[#allocation7 + $0x8] sm:$0xf]
        %v697 = vld [vmem:[#allocation7 + $0xc] sm:$0xf]
        %v698 = vld [vmem:[#allocation7 + $0x10] sm:$0xf]
        %v699 = vld [vmem:[#allocation7 + $0x14] sm:$0xf]
        %v700 = vld [vmem:[#allocation7 + $0x18] sm:$0xf]
        %v701 = vld [vmem:[#allocation7 + $0x1c] sm:$0xf]
        %v702 = vld [vmem:[#allocation7 + $0x20] sm:$0xf]
        %v703 = vld [vmem:[#allocation7 + $0x24] sm:$0xf]
        %v704 = vld [vmem:[#allocation7 + $0x28] sm:$0xf]
        %v705 = vld [vmem:[#allocation7 + $0x2c] sm:$0xf]
        %v706 = vld [vmem:[#allocation7 + $0x30] sm:$0xf]
        %v707 = vld [vmem:[#allocation7 + $0x34] sm:$0xf]
        %v708 = vld [vmem:[#allocation7 + $0x38] sm:$0xf]
        %v709 = vld [vmem:[#allocation7 + $0x3c] sm:$0xf]
        %v710 = vld [vmem:[%s3] sm:$0x1]
        %v712 = vlaneseq
        %v713 = vshrl.u32 %v712, 7
        %v714 = vsub.s32 0, %v713
        %v715 = vrot.slane %v710, %v714
        %v719 = vunpack.c.l.b16 %v692
        %v720 = vunpack.c.l.b16 %v693
        %v721 = vpack.c.b16 %v720, %v719
        %v739 = vunpack.c.l.b16 %v694
        %v740 = vunpack.c.l.b16 %v695
        %v741 = vunpack.c.l.b16 %v696
        %v742 = vunpack.c.l.b16 %v697
        %v743 = vunpack.c.l.b16 %v698
        %v744 = vunpack.c.l.b16 %v699
        %v745 = vunpack.c.l.b16 %v700
        %v746 = vunpack.c.l.b16 %v701
        %v747 = vunpack.c.l.b16 %v702
        %v748 = vunpack.c.l.b16 %v703
        %v749 = vunpack.c.l.b16 %v704
        %v750 = vunpack.c.l.b16 %v705
        %v751 = vunpack.c.l.b16 %v706
        %v752 = vunpack.c.l.b16 %v707
        %v753 = vunpack.c.l.b16 %v708
        %v754 = vunpack.c.l.b16 %v709
        %v755 = vpack.c.b16 %v740, %v739
        %v756 = vpack.c.b16 %v742, %v741
        %v757 = vpack.c.b16 %v744, %v743
        %v758 = vpack.c.b16 %v746, %v745
        %v759 = vpack.c.b16 %v748, %v747
        %v760 = vpack.c.b16 %v750, %v749
        %v761 = vpack.c.b16 %v752, %v751
        %v762 = vpack.c.b16 %v754, %v753
        %771 = vmatprep.subr.bf16.mxu0 0
        %772 = vmatpush1.bf16.msra.mxu0 %v762
        %773 = vmatprep.subr.bf16.mxu0 0
        %774 = vmatpush1.bf16.msra.mxu0 %v761
        %775 = vmatprep.subr.bf16.mxu0 0
        %776 = vmatpush1.bf16.msra.mxu0 %v760
        %777 = vmatprep.subr.bf16.mxu0 0
        %778 = vmatpush1.bf16.msra.mxu0 %v759
        %779 = vmatprep.subr.bf16.mxu0 0
        %780 = vmatpush1.bf16.msra.mxu0 %v758
        %781 = vmatprep.subr.bf16.mxu0 0
        %782 = vmatpush1.bf16.msra.mxu0 %v757
        %783 = vmatprep.subr.bf16.mxu0 0
        %784 = vmatpush1.bf16.msra.mxu0 %v756
        %785 = vmatprep.subr.bf16.mxu0 0
        %786 = vmatpush1.bf16.msra.mxu0 %v755
        %787 = vmatprep.subr.bf16.mxu0 0
        %788 = vmatpush2.bf16.msra.mxu0 0
        %789 = vmatprep.subr.bf16.mxu0 0
        %790 = vmatpush2.bf16.msra.mxu0 0
        %791 = vmatprep.subr.bf16.mxu0 0
        %792 = vmatpush2.bf16.msra.mxu0 0
        %793 = vmatprep.subr.bf16.mxu0 0
        %794 = vmatpush2.bf16.msra.mxu0 0
        %795 = vmatprep.subr.bf16.mxu0 0
        %796 = vmatpush2.bf16.msra.mxu0 0
        %797 = vmatprep.subr.bf16.mxu0 0
        %798 = vmatpush2.bf16.msra.mxu0 0
        %799 = vmatprep.subr.bf16.mxu0 0
        %800 = vmatpush2.bf16.msra.mxu0 0
        %801 = vmatprep.subr.bf16.mxu0 0
        %802 = vmatpush2.bf16.msra.mxu0 0
        %803 = vmatprep.mubr.bf16.mxu0 0
        %804 = vmatmul.mubr.bf16.gmra.mxu0 %v721
        %v805 = vpop.f32.mrf.mxu0
        %v806 = vadd.f32 %v715, %v805
        %v807 = vpop.f32.mrf.mxu0
        %v808 = vpop.f32.mrf.mxu0
        %v809 = vadd.f32 %v715, %v808
        %v810 = vpop.f32.mrf.mxu0
        %811 = vdwg.mxu0
        %v812 = vmax.f32 %v806, 0.0
        %v813 = vmax.f32 %v809, 0.0
        %v814 = vpack.c.bf16 %v813, %v812
        %v815 = vld [vmem:[#allocation8] sm:$0xf]
        %v816 = vld [vmem:[#allocation8 + $0x4] sm:$0xf]
        %v817 = vld [vmem:[#allocation8 + $0x8] sm:$0xf]
        %v818 = vld [vmem:[#allocation8 + $0xc] sm:$0xf]
        %v819 = vld [vmem:[#allocation8 + $0x10] sm:$0xf]
        %v820 = vld [vmem:[#allocation8 + $0x14] sm:$0xf]
        %v821 = vld [vmem:[#allocation8 + $0x18] sm:$0xf]
        %v822 = vld [vmem:[#allocation8 + $0x1c] sm:$0xf]
        %v823 = vld [vmem:[#allocation8 + $0x20] sm:$0xf]
        %v824 = vld [vmem:[#allocation8 + $0x24] sm:$0xf]
        %v825 = vld [vmem:[#allocation8 + $0x28] sm:$0xf]
        %v826 = vld [vmem:[#allocation8 + $0x2c] sm:$0xf]
        %v827 = vld [vmem:[#allocation8 + $0x30] sm:$0xf]
        %v828 = vld [vmem:[#allocation8 + $0x34] sm:$0xf]
        %v829 = vld [vmem:[#allocation8 + $0x38] sm:$0xf]
        %v830 = vld [vmem:[#allocation8 + $0x3c] sm:$0xf]
        %v831 = vld [vmem:[%s5] sm:$0x1]
        %v833 = vlaneseq
        %v834 = vshrl.u32 %v833, 7
        %v835 = vsub.s32 0, %v834
        %v836 = vrot.slane %v831, %v835
        %v854 = vunpack.c.l.b16 %v815
        %v855 = vunpack.c.l.b16 %v816
        %v856 = vunpack.c.l.b16 %v817
        %v857 = vunpack.c.l.b16 %v818
        %v858 = vunpack.c.l.b16 %v819
        %v859 = vunpack.c.l.b16 %v820
        %v860 = vunpack.c.l.b16 %v821
        %v861 = vunpack.c.l.b16 %v822
        %v862 = vunpack.c.l.b16 %v823
        %v863 = vunpack.c.l.b16 %v824
        %v864 = vunpack.c.l.b16 %v825
        %v865 = vunpack.c.l.b16 %v826
        %v866 = vunpack.c.l.b16 %v827
        %v867 = vunpack.c.l.b16 %v828
        %v868 = vunpack.c.l.b16 %v829
        %v869 = vunpack.c.l.b16 %v830
        %v870 = vpack.c.b16 %v855, %v854
        %v871 = vpack.c.b16 %v857, %v856
        %v872 = vpack.c.b16 %v859, %v858
        %v873 = vpack.c.b16 %v861, %v860
        %v874 = vpack.c.b16 %v863, %v862
        %v875 = vpack.c.b16 %v865, %v864
        %v876 = vpack.c.b16 %v867, %v866
        %v877 = vpack.c.b16 %v869, %v868
        %886 = vmatprep.subr.bf16.mxu0 0
        %887 = vmatpush1.bf16.msra.mxu0 %v877
        %888 = vmatprep.subr.bf16.mxu0 0
        %889 = vmatpush1.bf16.msra.mxu0 %v876
        %890 = vmatprep.subr.bf16.mxu0 0
        %891 = vmatpush1.bf16.msra.mxu0 %v875
        %892 = vmatprep.subr.bf16.mxu0 0
        %893 = vmatpush1.bf16.msra.mxu0 %v874
        %894 = vmatprep.subr.bf16.mxu0 0
        %895 = vmatpush1.bf16.msra.mxu0 %v873
        %896 = vmatprep.subr.bf16.mxu0 0
        %897 = vmatpush1.bf16.msra.mxu0 %v872
        %898 = vmatprep.subr.bf16.mxu0 0
        %899 = vmatpush1.bf16.msra.mxu0 %v871
        %900 = vmatprep.subr.bf16.mxu0 0
        %901 = vmatpush1.bf16.msra.mxu0 %v870
        %902 = vmatprep.subr.bf16.mxu0 0
        %903 = vmatpush2.bf16.msra.mxu0 0
        %904 = vmatprep.subr.bf16.mxu0 0
        %905 = vmatpush2.bf16.msra.mxu0 0
        %906 = vmatprep.subr.bf16.mxu0 0
        %907 = vmatpush2.bf16.msra.mxu0 0
        %908 = vmatprep.subr.bf16.mxu0 0
        %909 = vmatpush2.bf16.msra.mxu0 0
        %910 = vmatprep.subr.bf16.mxu0 0
        %911 = vmatpush2.bf16.msra.mxu0 0
        %912 = vmatprep.subr.bf16.mxu0 0
        %913 = vmatpush2.bf16.msra.mxu0 0
        %914 = vmatprep.subr.bf16.mxu0 0
        %915 = vmatpush2.bf16.msra.mxu0 0
        %916 = vmatprep.subr.bf16.mxu0 0
        %917 = vmatpush2.bf16.msra.mxu0 0
        %918 = vmatprep.mubr.bf16.mxu0 0
        %919 = vmatmul.mubr.bf16.gmra.mxu0 %v814
        %v920 = vpop.f32.mrf.mxu0
        %v921 = vadd.f32 %v836, %v920
        %v922 = vpop.f32.mrf.mxu0
        %v923 = vpop.f32.mrf.mxu0
        %v924 = vadd.f32 %v836, %v923
        %v925 = vpop.f32.mrf.mxu0
        %926 = vdwg.mxu0
        %v927 = vmax.f32 %v921, 0.0
        %v928 = vmax.f32 %v924, 0.0
        %v929 = vpack.c.bf16 %v928, %v927
        %v930 = vld [vmem:[#allocation10] sm:$0xff]
        %v931 = vld [vmem:[#allocation10 + $0x8] sm:$0xff]
        %v932 = vld [vmem:[#allocation10 + $0x10] sm:$0xff]
        %v933 = vld [vmem:[#allocation10 + $0x18] sm:$0xff]
        %v934 = vld [vmem:[#allocation10 + $0x20] sm:$0xff]
        %v935 = vld [vmem:[#allocation10 + $0x28] sm:$0xff]
        %v936 = vld [vmem:[#allocation10 + $0x30] sm:$0xff]
        %v937 = vld [vmem:[#allocation10 + $0x38] sm:$0xff]
        %v938 = vld [vmem:[#allocation10 + $0x40] sm:$0xff]
        %v939 = vld [vmem:[#allocation10 + $0x48] sm:$0xff]
        %v940 = vld [vmem:[#allocation10 + $0x50] sm:$0xff]
        %v941 = vld [vmem:[#allocation10 + $0x58] sm:$0xff]
        %v942 = vld [vmem:[#allocation10 + $0x60] sm:$0xff]
        %v943 = vld [vmem:[#allocation10 + $0x68] sm:$0xff]
        %v944 = vld [vmem:[#allocation10 + $0x70] sm:$0xff]
        %v945 = vld [vmem:[#allocation10 + $0x78] sm:$0xff]
        %v946 = vld [vmem:[%s7] sm:$0x3]
        %v948 = vlaneseq
        %v949 = vshrl.u32 %v948, 7
        %v950 = vsub.s32 0, %v949
        %v951 = vrot.slane %v946, %v950
        %v952 = vlaneseq
        %v953 = vshrl.u32 %v952, 7
        %v954 = vsub.s32 1, %v953
        %v955 = vrot.slane %v946, %v954
        %v974 = vunpack.c.l.b16 %v930
        %v975 = vunpack.c.h.b16 %v930
        %v976 = vunpack.c.l.b16 %v931
        %v977 = vunpack.c.h.b16 %v931
        %v978 = vunpack.c.l.b16 %v932
        %v979 = vunpack.c.h.b16 %v932
        %v980 = vunpack.c.l.b16 %v933
        %v981 = vunpack.c.h.b16 %v933
        %v982 = vunpack.c.l.b16 %v934
        %v983 = vunpack.c.h.b16 %v934
        %v984 = vunpack.c.l.b16 %v935
        %v985 = vunpack.c.h.b16 %v935
        %v986 = vunpack.c.l.b16 %v936
        %v987 = vunpack.c.h.b16 %v936
        %v988 = vunpack.c.l.b16 %v937
        %v989 = vunpack.c.h.b16 %v937
        %v990 = vunpack.c.l.b16 %v938
        %v991 = vunpack.c.h.b16 %v938
        %v992 = vunpack.c.l.b16 %v939
        %v993 = vunpack.c.h.b16 %v939
        %v994 = vunpack.c.l.b16 %v940
        %v995 = vunpack.c.h.b16 %v940
        %v996 = vunpack.c.l.b16 %v941
        %v997 = vunpack.c.h.b16 %v941
        %v998 = vunpack.c.l.b16 %v942
        %v999 = vunpack.c.h.b16 %v942
        %v1000 = vunpack.c.l.b16 %v943
        %v1001 = vunpack.c.h.b16 %v943
        %v1002 = vunpack.c.l.b16 %v944
        %v1003 = vunpack.c.h.b16 %v944
        %v1004 = vunpack.c.l.b16 %v945
        %v1005 = vunpack.c.h.b16 %v945
        %v1006 = vpack.c.b16 %v976, %v974
        %v1007 = vpack.c.b16 %v977, %v975
        %v1008 = vpack.c.b16 %v980, %v978
        %v1009 = vpack.c.b16 %v981, %v979
        %v1010 = vpack.c.b16 %v984, %v982
        %v1011 = vpack.c.b16 %v985, %v983
        %v1012 = vpack.c.b16 %v988, %v986
        %v1013 = vpack.c.b16 %v989, %v987
        %v1014 = vpack.c.b16 %v992, %v990
        %v1015 = vpack.c.b16 %v993, %v991
        %v1016 = vpack.c.b16 %v996, %v994
        %v1017 = vpack.c.b16 %v997, %v995
        %v1018 = vpack.c.b16 %v1000, %v998
        %v1019 = vpack.c.b16 %v1001, %v999
        %v1020 = vpack.c.b16 %v1004, %v1002
        %v1021 = vpack.c.b16 %v1005, %v1003
        %1038 = vmatprep.subr.bf16.mxu0 %v1021
        %1039 = vmatpush1.bf16.msra.mxu0 %v1020
        %1040 = vmatprep.subr.bf16.mxu0 %v1019
        %1041 = vmatpush1.bf16.msra.mxu0 %v1018
        %1042 = vmatprep.subr.bf16.mxu0 %v1017
        %1043 = vmatpush1.bf16.msra.mxu0 %v1016
        %1044 = vmatprep.subr.bf16.mxu0 %v1015
        %1045 = vmatpush1.bf16.msra.mxu0 %v1014
        %1046 = vmatprep.subr.bf16.mxu0 %v1013
        %1047 = vmatpush1.bf16.msra.mxu0 %v1012
        %1048 = vmatprep.subr.bf16.mxu0 %v1011
        %1049 = vmatpush1.bf16.msra.mxu0 %v1010
        %1050 = vmatprep.subr.bf16.mxu0 %v1009
        %1051 = vmatpush1.bf16.msra.mxu0 %v1008
        %1052 = vmatprep.subr.bf16.mxu0 %v1007
        %1053 = vmatpush1.bf16.msra.mxu0 %v1006
        %1054 = vmatprep.subr.bf16.mxu0 0
        %1055 = vmatpush2.bf16.msra.mxu0 0
        %1056 = vmatprep.subr.bf16.mxu0 0
        %1057 = vmatpush2.bf16.msra.mxu0 0
        %1058 = vmatprep.subr.bf16.mxu0 0
        %1059 = vmatpush2.bf16.msra.mxu0 0
        %1060 = vmatprep.subr.bf16.mxu0 0
        %1061 = vmatpush2.bf16.msra.mxu0 0
        %1062 = vmatprep.subr.bf16.mxu0 0
        %1063 = vmatpush2.bf16.msra.mxu0 0
        %1064 = vmatprep.subr.bf16.mxu0 0
        %1065 = vmatpush2.bf16.msra.mxu0 0
        %1066 = vmatprep.subr.bf16.mxu0 0
        %1067 = vmatpush2.bf16.msra.mxu0 0
        %1068 = vmatprep.subr.bf16.mxu0 0
        %1069 = vmatpush2.bf16.msra.mxu0 0
        %1070 = vmatprep.mubr.bf16.mxu0 0
        %1071 = vmatmul.mubr.bf16.gmra.mxu0 %v929
        %v1072 = vpop.f32.mrf.mxu0
        %v1073 = vadd.f32 %v951, %v1072
        %v1074 = vpop.f32.mrf.mxu0
        %v1075 = vadd.f32 %v955, %v1074
        %v1076 = vpop.f32.mrf.mxu0
        %v1077 = vadd.f32 %v951, %v1076
        %v1078 = vpop.f32.mrf.mxu0
        %v1079 = vadd.f32 %v955, %v1078
        %1080 = vdwg.mxu0
        %1081 = vst [vmem:[%s671] sm:$0xff] %v1073
        %1082 = vst [vmem:[%s671 + $0x8] sm:$0xff] %v1075
        %1083 = vst [vmem:[%s671 + $0x10] sm:$0xff] %v1077
        %1084 = vst [vmem:[%s671 + $0x18] sm:$0xff] %v1079
        %v1085 = vmul.f32 %v1075, 0.5
        %v1086 = vmul.f32 %v1079, 0.5
        %v1087 = vmul.f32 %v1085, 1.442695
        %v1088 = vpow.pop %v1087
        %v1089 = vmul.f32 %v1086, 1.442695
        %v1090 = vpow.pop %v1089
        %v1091 = vld [vmem:[%s598] sm:$0xf]
        %v1092 = vld [vmem:[%s598 + $0x10] sm:$0xf]
        %v1093 = vunpack.c.l.bf16 %v1091
        %v1094 = vunpack.c.l.bf16 %v1092
        %v1095 = vmul.f32 %v1088, %v1093
        %v1096 = vmul.f32 %v1090, %v1094
        %v1097 = vadd.f32 %v1073, %v1095
        %v1098 = vadd.f32 %v1077, %v1096
        %1099 = vst [vmem:[%s678] sm:$0xff] %v1097
        %1100 = vst [vmem:[%s678 + $0x20] sm:$0xff] %v1098
        %v1101 = vpack.c.bf16 %v1098, %v1097
        %v1102 = vld [vmem:[%s598 + $0x4] sm:$0xf]
        %v1103 = vld [vmem:[%s598 + $0x14] sm:$0xf]
        %v1104 = vunpack.c.l.bf16 %v1102
        %v1105 = vunpack.c.l.bf16 %v1103
        %v1106 = vmul.f32 %v1088, %v1104
        %v1107 = vmul.f32 %v1090, %v1105
        %v1108 = vadd.f32 %v1073, %v1106
        %v1109 = vadd.f32 %v1077, %v1107
        %1110 = vst [vmem:[%s678 + $0x8] sm:$0xff] %v1108
        %1111 = vst [vmem:[%s678 + $0x28] sm:$0xff] %v1109
        %v1112 = vpack.c.bf16 %v1109, %v1108
        %v1113 = vld [vmem:[%s598 + $0x8] sm:$0xf]
        %v1114 = vld [vmem:[%s598 + $0x18] sm:$0xf]
        %v1115 = vunpack.c.l.bf16 %v1113
        %v1116 = vunpack.c.l.bf16 %v1114
        %v1117 = vmul.f32 %v1088, %v1115
        %v1118 = vmul.f32 %v1090, %v1116
        %v1119 = vadd.f32 %v1073, %v1117
        %v1120 = vadd.f32 %v1077, %v1118
        %1121 = vst [vmem:[%s678 + $0x10] sm:$0xff] %v1119
        %1122 = vst [vmem:[%s678 + $0x30] sm:$0xff] %v1120
        %v1123 = vpack.c.bf16 %v1120, %v1119
        %v1124 = vld [vmem:[%s598 + $0xc] sm:$0xf]
        %v1125 = vld [vmem:[%s598 + $0x1c] sm:$0xf]
        %v1126 = vunpack.c.l.bf16 %v1124
        %v1127 = vunpack.c.l.bf16 %v1125
        %v1128 = vmul.f32 %v1088, %v1126
        %v1129 = vmul.f32 %v1090, %v1127
        %v1130 = vadd.f32 %v1073, %v1128
        %v1131 = vadd.f32 %v1077, %v1129
        %1132 = vst [vmem:[%s678 + $0x18] sm:$0xff] %v1130
        %1133 = vst [vmem:[%s678 + $0x38] sm:$0xff] %v1131
        %v1134 = vpack.c.bf16 %v1131, %v1130
        %v1135 = vld [vmem:[#allocation11] sm:$0xf]
        %v1136 = vld [vmem:[#allocation11 + $0x4] sm:$0xf]
        %v1137 = vld [vmem:[#allocation11 + $0x8] sm:$0xf]
        %v1138 = vld [vmem:[#allocation11 + $0xc] sm:$0xf]
        %v1139 = vld [vmem:[#allocation11 + $0x10] sm:$0xf]
        %v1140 = vld [vmem:[#allocation11 + $0x14] sm:$0xf]
        %v1141 = vld [vmem:[#allocation11 + $0x18] sm:$0xf]
        %v1142 = vld [vmem:[#allocation11 + $0x1c] sm:$0xf]
        %v1143 = vld [vmem:[#allocation11 + $0x20] sm:$0xf]
        %v1144 = vld [vmem:[#allocation11 + $0x24] sm:$0xf]
        %v1145 = vld [vmem:[#allocation11 + $0x28] sm:$0xf]
        %v1146 = vld [vmem:[#allocation11 + $0x2c] sm:$0xf]
        %v1147 = vld [vmem:[#allocation11 + $0x30] sm:$0xf]
        %v1148 = vld [vmem:[#allocation11 + $0x34] sm:$0xf]
        %v1149 = vld [vmem:[#allocation11 + $0x38] sm:$0xf]
        %v1150 = vld [vmem:[#allocation11 + $0x3c] sm:$0xf]
        %v1151 = vld [vmem:[%s9] sm:$0x1]
        %v1153 = vlaneseq
        %v1154 = vshrl.u32 %v1153, 7
        %v1155 = vsub.s32 0, %v1154
        %v1156 = vrot.slane %v1151, %v1155
        %v1174 = vunpack.c.l.b16 %v1135
        %v1175 = vunpack.c.l.b16 %v1136
        %v1176 = vunpack.c.l.b16 %v1137
        %v1177 = vunpack.c.l.b16 %v1138
        %v1178 = vunpack.c.l.b16 %v1139
        %v1179 = vunpack.c.l.b16 %v1140
        %v1180 = vunpack.c.l.b16 %v1141
        %v1181 = vunpack.c.l.b16 %v1142
        %v1182 = vunpack.c.l.b16 %v1143
        %v1183 = vunpack.c.l.b16 %v1144
        %v1184 = vunpack.c.l.b16 %v1145
        %v1185 = vunpack.c.l.b16 %v1146
        %v1186 = vunpack.c.l.b16 %v1147
        %v1187 = vunpack.c.l.b16 %v1148
        %v1188 = vunpack.c.l.b16 %v1149
        %v1189 = vunpack.c.l.b16 %v1150
        %v1190 = vpack.c.b16 %v1175, %v1174
        %v1191 = vpack.c.b16 %v1177, %v1176
        %v1192 = vpack.c.b16 %v1179, %v1178
        %v1193 = vpack.c.b16 %v1181, %v1180
        %v1194 = vpack.c.b16 %v1183, %v1182
        %v1195 = vpack.c.b16 %v1185, %v1184
        %v1196 = vpack.c.b16 %v1187, %v1186
        %v1197 = vpack.c.b16 %v1189, %v1188
        %1206 = vmatprep.subr.bf16.mxu0 0
        %1207 = vmatpush1.bf16.msra.mxu0 %v1197
        %1208 = vmatprep.subr.bf16.mxu0 0
        %1209 = vmatpush1.bf16.msra.mxu0 %v1196
        %1210 = vmatprep.subr.bf16.mxu0 0
        %1211 = vmatpush1.bf16.msra.mxu0 %v1195
        %1212 = vmatprep.subr.bf16.mxu0 0
        %1213 = vmatpush1.bf16.msra.mxu0 %v1194
        %1214 = vmatprep.subr.bf16.mxu0 0
        %1215 = vmatpush1.bf16.msra.mxu0 %v1193
        %1216 = vmatprep.subr.bf16.mxu0 0
        %1217 = vmatpush1.bf16.msra.mxu0 %v1192
        %1218 = vmatprep.subr.bf16.mxu0 0
        %1219 = vmatpush1.bf16.msra.mxu0 %v1191
        %1220 = vmatprep.subr.bf16.mxu0 0
        %1221 = vmatpush1.bf16.msra.mxu0 %v1190
        %1222 = vmatprep.subr.bf16.mxu0 0
        %1223 = vmatpush2.bf16.msra.mxu0 0
        %1224 = vmatprep.subr.bf16.mxu0 0
        %1225 = vmatpush2.bf16.msra.mxu0 0
        %1226 = vmatprep.subr.bf16.mxu0 0
        %1227 = vmatpush2.bf16.msra.mxu0 0
        %1228 = vmatprep.subr.bf16.mxu0 0
        %1229 = vmatpush2.bf16.msra.mxu0 0
        %1230 = vmatprep.subr.bf16.mxu0 0
        %1231 = vmatpush2.bf16.msra.mxu0 0
        %1232 = vmatprep.subr.bf16.mxu0 0
        %1233 = vmatpush2.bf16.msra.mxu0 0
        %1234 = vmatprep.subr.bf16.mxu0 0
        %1235 = vmatpush2.bf16.msra.mxu0 0
        %1236 = vmatprep.subr.bf16.mxu0 0
        %1237 = vmatpush2.bf16.msra.mxu0 0
        %1238 = vmatprep.mubr.bf16.mxu0 0
        %1239 = vmatmul.mubr.bf16.gmra.mxu0 %v1101
        %v1240 = vpop.f32.mrf.mxu0
        %v1241 = vadd.f32 %v1156, %v1240
        %v1242 = vpop.f32.mrf.mxu0
        %v1243 = vpop.f32.mrf.mxu0
        %v1244 = vadd.f32 %v1156, %v1243
        %v1245 = vpop.f32.mrf.mxu0
        %1246 = vmatprep.mubr.bf16.mxu0 0
        %1247 = vmatmul.mubr.bf16.gmra.mxu0 %v1112
        %v1248 = vpop.f32.mrf.mxu0
        %v1249 = vadd.f32 %v1156, %v1248
        %v1250 = vpop.f32.mrf.mxu0
        %v1251 = vpop.f32.mrf.mxu0
        %v1252 = vadd.f32 %v1156, %v1251
        %v1253 = vpop.f32.mrf.mxu0
        %1254 = vmatprep.mubr.bf16.mxu0 0
        %1255 = vmatmul.mubr.bf16.gmra.mxu0 %v1123
        %v1256 = vpop.f32.mrf.mxu0
        %v1257 = vadd.f32 %v1156, %v1256
        %v1258 = vpop.f32.mrf.mxu0
        %v1259 = vpop.f32.mrf.mxu0
        %v1260 = vadd.f32 %v1156, %v1259
        %v1261 = vpop.f32.mrf.mxu0
        %1262 = vmatprep.mubr.bf16.mxu0 0
        %1263 = vmatmul.mubr.bf16.gmra.mxu0 %v1134
        %v1264 = vpop.f32.mrf.mxu0
        %v1265 = vadd.f32 %v1156, %v1264
        %v1266 = vpop.f32.mrf.mxu0
        %v1267 = vpop.f32.mrf.mxu0
        %v1268 = vadd.f32 %v1156, %v1267
        %v1269 = vpop.f32.mrf.mxu0
        %1270 = vdwg.mxu0
        %v1271 = vmax.f32 %v1241, 0.0
        %v1272 = vmax.f32 %v1244, 0.0
        %v1273 = vmax.f32 %v1249, 0.0
        %v1274 = vmax.f32 %v1252, 0.0
        %v1275 = vmax.f32 %v1257, 0.0
        %v1276 = vmax.f32 %v1260, 0.0
        %v1277 = vmax.f32 %v1265, 0.0
        %v1278 = vmax.f32 %v1268, 0.0
        %v1279 = vpack.c.bf16 %v1272, %v1271
        %v1280 = vpack.c.bf16 %v1274, %v1273
        %v1281 = vpack.c.bf16 %v1276, %v1275
        %v1282 = vpack.c.bf16 %v1278, %v1277
        %v1283 = vld [vmem:[#allocation13] sm:$0xf]
        %v1284 = vld [vmem:[#allocation13 + $0x4] sm:$0xf]
        %v1285 = vld [vmem:[#allocation13 + $0x8] sm:$0xf]
        %v1286 = vld [vmem:[#allocation13 + $0xc] sm:$0xf]
        %v1287 = vld [vmem:[#allocation13 + $0x10] sm:$0xf]
        %v1288 = vld [vmem:[#allocation13 + $0x14] sm:$0xf]
        %v1289 = vld [vmem:[#allocation13 + $0x18] sm:$0xf]
        %v1290 = vld [vmem:[#allocation13 + $0x1c] sm:$0xf]
        %v1291 = vld [vmem:[#allocation13 + $0x20] sm:$0xf]
        %v1292 = vld [vmem:[#allocation13 + $0x24] sm:$0xf]
        %v1293 = vld [vmem:[#allocation13 + $0x28] sm:$0xf]
        %v1294 = vld [vmem:[#allocation13 + $0x2c] sm:$0xf]
        %v1295 = vld [vmem:[#allocation13 + $0x30] sm:$0xf]
        %v1296 = vld [vmem:[#allocation13 + $0x34] sm:$0xf]
        %v1297 = vld [vmem:[#allocation13 + $0x38] sm:$0xf]
        %v1298 = vld [vmem:[#allocation13 + $0x3c] sm:$0xf]
        %v1299 = vld [vmem:[%s11] sm:$0x1]
        %v1301 = vlaneseq
        %v1302 = vshrl.u32 %v1301, 7
        %v1303 = vsub.s32 0, %v1302
        %v1304 = vrot.slane %v1299, %v1303
        %v1322 = vunpack.c.l.b16 %v1283
        %v1323 = vunpack.c.l.b16 %v1284
        %v1324 = vunpack.c.l.b16 %v1285
        %v1325 = vunpack.c.l.b16 %v1286
        %v1326 = vunpack.c.l.b16 %v1287
        %v1327 = vunpack.c.l.b16 %v1288
        %v1328 = vunpack.c.l.b16 %v1289
        %v1329 = vunpack.c.l.b16 %v1290
        %v1330 = vunpack.c.l.b16 %v1291
        %v1331 = vunpack.c.l.b16 %v1292
        %v1332 = vunpack.c.l.b16 %v1293
        %v1333 = vunpack.c.l.b16 %v1294
        %v1334 = vunpack.c.l.b16 %v1295
        %v1335 = vunpack.c.l.b16 %v1296
        %v1336 = vunpack.c.l.b16 %v1297
        %v1337 = vunpack.c.l.b16 %v1298
        %v1338 = vpack.c.b16 %v1323, %v1322
        %v1339 = vpack.c.b16 %v1325, %v1324
        %v1340 = vpack.c.b16 %v1327, %v1326
        %v1341 = vpack.c.b16 %v1329, %v1328
        %v1342 = vpack.c.b16 %v1331, %v1330
        %v1343 = vpack.c.b16 %v1333, %v1332
        %v1344 = vpack.c.b16 %v1335, %v1334
        %v1345 = vpack.c.b16 %v1337, %v1336
        %1354 = vmatprep.subr.bf16.mxu0 0
        %1355 = vmatpush1.bf16.msra.mxu0 %v1345
        %1356 = vmatprep.subr.bf16.mxu0 0
        %1357 = vmatpush1.bf16.msra.mxu0 %v1344
        %1358 = vmatprep.subr.bf16.mxu0 0
        %1359 = vmatpush1.bf16.msra.mxu0 %v1343
        %1360 = vmatprep.subr.bf16.mxu0 0
        %1361 = vmatpush1.bf16.msra.mxu0 %v1342
        %1362 = vmatprep.subr.bf16.mxu0 0
        %1363 = vmatpush1.bf16.msra.mxu0 %v1341
        %1364 = vmatprep.subr.bf16.mxu0 0
        %1365 = vmatpush1.bf16.msra.mxu0 %v1340
        %1366 = vmatprep.subr.bf16.mxu0 0
        %1367 = vmatpush1.bf16.msra.mxu0 %v1339
        %1368 = vmatprep.subr.bf16.mxu0 0
        %1369 = vmatpush1.bf16.msra.mxu0 %v1338
        %1370 = vmatprep.subr.bf16.mxu0 0
        %1371 = vmatpush2.bf16.msra.mxu0 0
        %1372 = vmatprep.subr.bf16.mxu0 0
        %1373 = vmatpush2.bf16.msra.mxu0 0
        %1374 = vmatprep.subr.bf16.mxu0 0
        %1375 = vmatpush2.bf16.msra.mxu0 0
        %1376 = vmatprep.subr.bf16.mxu0 0
        %1377 = vmatpush2.bf16.msra.mxu0 0
        %1378 = vmatprep.subr.bf16.mxu0 0
        %1379 = vmatpush2.bf16.msra.mxu0 0
        %1380 = vmatprep.subr.bf16.mxu0 0
        %1381 = vmatpush2.bf16.msra.mxu0 0
        %1382 = vmatprep.subr.bf16.mxu0 0
        %1383 = vmatpush2.bf16.msra.mxu0 0
        %1384 = vmatprep.subr.bf16.mxu0 0
        %1385 = vmatpush2.bf16.msra.mxu0 0
        %1386 = vmatprep.mubr.bf16.mxu0 0
        %1387 = vmatmul.mubr.bf16.gmra.mxu0 %v1279
        %v1388 = vpop.f32.mrf.mxu0
        %v1389 = vadd.f32 %v1304, %v1388
        %v1390 = vpop.f32.mrf.mxu0
        %v1391 = vpop.f32.mrf.mxu0
        %v1392 = vadd.f32 %v1304, %v1391
        %v1393 = vpop.f32.mrf.mxu0
        %1394 = vmatprep.mubr.bf16.mxu0 0
        %1395 = vmatmul.mubr.bf16.gmra.mxu0 %v1280
        %v1396 = vpop.f32.mrf.mxu0
        %v1397 = vadd.f32 %v1304, %v1396
        %v1398 = vpop.f32.mrf.mxu0
        %v1399 = vpop.f32.mrf.mxu0
        %v1400 = vadd.f32 %v1304, %v1399
        %v1401 = vpop.f32.mrf.mxu0
        %1402 = vmatprep.mubr.bf16.mxu0 0
        %1403 = vmatmul.mubr.bf16.gmra.mxu0 %v1281
        %v1404 = vpop.f32.mrf.mxu0
        %v1405 = vadd.f32 %v1304, %v1404
        %v1406 = vpop.f32.mrf.mxu0
        %v1407 = vpop.f32.mrf.mxu0
        %v1408 = vadd.f32 %v1304, %v1407
        %v1409 = vpop.f32.mrf.mxu0
        %1410 = vmatprep.mubr.bf16.mxu0 0
        %1411 = vmatmul.mubr.bf16.gmra.mxu0 %v1282
        %v1412 = vpop.f32.mrf.mxu0
        %v1413 = vadd.f32 %v1304, %v1412
        %v1414 = vpop.f32.mrf.mxu0
        %v1415 = vpop.f32.mrf.mxu0
        %v1416 = vadd.f32 %v1304, %v1415
        %v1417 = vpop.f32.mrf.mxu0
        %1418 = vdwg.mxu0
        %v1419 = vmax.f32 %v1389, 0.0
        %v1420 = vmax.f32 %v1392, 0.0
        %v1421 = vmax.f32 %v1397, 0.0
        %v1422 = vmax.f32 %v1400, 0.0
        %v1423 = vmax.f32 %v1405, 0.0
        %v1424 = vmax.f32 %v1408, 0.0
        %v1425 = vmax.f32 %v1413, 0.0
        %v1426 = vmax.f32 %v1416, 0.0
        %v1427 = vpack.c.bf16 %v1420, %v1419
        %v1428 = vpack.c.bf16 %v1422, %v1421
        %v1429 = vpack.c.bf16 %v1424, %v1423
        %v1430 = vpack.c.bf16 %v1426, %v1425
        %v1431 = vld [vmem:[#allocation14] sm:$0xf]
        %v1432 = vld [vmem:[#allocation14 + $0x4] sm:$0xf]
        %v1433 = vld [vmem:[#allocation14 + $0x8] sm:$0xf]
        %v1434 = vld [vmem:[#allocation14 + $0xc] sm:$0xf]
        %v1435 = vld [vmem:[#allocation14 + $0x10] sm:$0xf]
        %v1436 = vld [vmem:[#allocation14 + $0x14] sm:$0xf]
        %v1437 = vld [vmem:[#allocation14 + $0x18] sm:$0xf]
        %v1438 = vld [vmem:[#allocation14 + $0x1c] sm:$0xf]
        %v1439 = vld [vmem:[#allocation14 + $0x20] sm:$0xf]
        %v1440 = vld [vmem:[#allocation14 + $0x24] sm:$0xf]
        %v1441 = vld [vmem:[#allocation14 + $0x28] sm:$0xf]
        %v1442 = vld [vmem:[#allocation14 + $0x2c] sm:$0xf]
        %v1443 = vld [vmem:[#allocation14 + $0x30] sm:$0xf]
        %v1444 = vld [vmem:[#allocation14 + $0x34] sm:$0xf]
        %v1445 = vld [vmem:[#allocation14 + $0x38] sm:$0xf]
        %v1446 = vld [vmem:[#allocation14 + $0x3c] sm:$0xf]
        %v1447 = vld [vmem:[%s13] sm:$0x1]
        %v1449 = vlaneseq
        %v1450 = vshrl.u32 %v1449, 7
        %v1451 = vsub.s32 0, %v1450
        %v1452 = vrot.slane %v1447, %v1451
        %v1470 = vunpack.c.l.b16 %v1431
        %v1471 = vunpack.c.l.b16 %v1432
        %v1472 = vunpack.c.l.b16 %v1433
        %v1473 = vunpack.c.l.b16 %v1434
        %v1474 = vunpack.c.l.b16 %v1435
        %v1475 = vunpack.c.l.b16 %v1436
        %v1476 = vunpack.c.l.b16 %v1437
        %v1477 = vunpack.c.l.b16 %v1438
        %v1478 = vunpack.c.l.b16 %v1439
        %v1479 = vunpack.c.l.b16 %v1440
        %v1480 = vunpack.c.l.b16 %v1441
        %v1481 = vunpack.c.l.b16 %v1442
        %v1482 = vunpack.c.l.b16 %v1443
        %v1483 = vunpack.c.l.b16 %v1444
        %v1484 = vunpack.c.l.b16 %v1445
        %v1485 = vunpack.c.l.b16 %v1446
        %v1486 = vpack.c.b16 %v1471, %v1470
        %v1487 = vpack.c.b16 %v1473, %v1472
        %v1488 = vpack.c.b16 %v1475, %v1474
        %v1489 = vpack.c.b16 %v1477, %v1476
        %v1490 = vpack.c.b16 %v1479, %v1478
        %v1491 = vpack.c.b16 %v1481, %v1480
        %v1492 = vpack.c.b16 %v1483, %v1482
        %v1493 = vpack.c.b16 %v1485, %v1484
        %1502 = vmatprep.subr.bf16.mxu0 0
        %1503 = vmatpush1.bf16.msra.mxu0 %v1493
        %1504 = vmatprep.subr.bf16.mxu0 0
        %1505 = vmatpush1.bf16.msra.mxu0 %v1492
        %1506 = vmatprep.subr.bf16.mxu0 0
        %1507 = vmatpush1.bf16.msra.mxu0 %v1491
        %1508 = vmatprep.subr.bf16.mxu0 0
        %1509 = vmatpush1.bf16.msra.mxu0 %v1490
        %1510 = vmatprep.subr.bf16.mxu0 0
        %1511 = vmatpush1.bf16.msra.mxu0 %v1489
        %1512 = vmatprep.subr.bf16.mxu0 0
        %1513 = vmatpush1.bf16.msra.mxu0 %v1488
        %1514 = vmatprep.subr.bf16.mxu0 0
        %1515 = vmatpush1.bf16.msra.mxu0 %v1487
        %1516 = vmatprep.subr.bf16.mxu0 0
        %1517 = vmatpush1.bf16.msra.mxu0 %v1486
        %1518 = vmatprep.subr.bf16.mxu0 0
        %1519 = vmatpush2.bf16.msra.mxu0 0
        %1520 = vmatprep.subr.bf16.mxu0 0
        %1521 = vmatpush2.bf16.msra.mxu0 0
        %1522 = vmatprep.subr.bf16.mxu0 0
        %1523 = vmatpush2.bf16.msra.mxu0 0
        %1524 = vmatprep.subr.bf16.mxu0 0
        %1525 = vmatpush2.bf16.msra.mxu0 0
        %1526 = vmatprep.subr.bf16.mxu0 0
        %1527 = vmatpush2.bf16.msra.mxu0 0
        %1528 = vmatprep.subr.bf16.mxu0 0
        %1529 = vmatpush2.bf16.msra.mxu0 0
        %1530 = vmatprep.subr.bf16.mxu0 0
        %1531 = vmatpush2.bf16.msra.mxu0 0
        %1532 = vmatprep.subr.bf16.mxu0 0
        %1533 = vmatpush2.bf16.msra.mxu0 0
        %1534 = vmatprep.mubr.bf16.mxu0 0
        %1535 = vmatmul.mubr.bf16.gmra.mxu0 %v1427
        %v1536 = vpop.f32.mrf.mxu0
        %v1537 = vadd.f32 %v1452, %v1536
        %v1538 = vpop.f32.mrf.mxu0
        %v1539 = vpop.f32.mrf.mxu0
        %v1540 = vadd.f32 %v1452, %v1539
        %v1541 = vpop.f32.mrf.mxu0
        %1542 = vdwg.mxu0
        %v1543 = vxor.u32 %v1537, 2147483648
        %v1544 = vxor.u32 %v1540, 2147483648
        %v1545 = vmul.f32 %v1543, 1.442695
        %v1546 = vpow.pop %v1545
        %v1547 = vmul.f32 %v1544, 1.442695
        %v1548 = vpow.pop %v1547
        %v1549 = vadd.f32 %v1546, 1.0
        %v1550 = vadd.f32 %v1548, 1.0
        %v1551 = vrcp.pop %v1549
        %v1552 = vmul.f32 1.0, %v1551
        %v1553 = vrcp.pop %v1550
        %v1554 = vmul.f32 1.0, %v1553
        %v1555 = vpack.c.bf16 %v1554, %v1552
        %v1557 = vunpack.c.l.b16 %v1555
        %v1558 = vunpack.c.h.b16 %v1555
        %v1559 = vpack.c.b16 %v1557, %v1557
        %v1560 = vpack.c.b16 %v1558, %v1558
        %1563 = vst [vmem:[%s685] sm:$0xf] %v1559
        %1564 = vst [vmem:[%s685 + $0x10] sm:$0xf] %v1560
        %1565 = vmatprep.subr.bf16.mxu0 0
        %1566 = vmatpush1.bf16.msra.mxu0 %v1493
        %1567 = vmatprep.subr.bf16.mxu0 0
        %1568 = vmatpush1.bf16.msra.mxu0 %v1492
        %1569 = vmatprep.subr.bf16.mxu0 0
        %1570 = vmatpush1.bf16.msra.mxu0 %v1491
        %1571 = vmatprep.subr.bf16.mxu0 0
        %1572 = vmatpush1.bf16.msra.mxu0 %v1490
        %1573 = vmatprep.subr.bf16.mxu0 0
        %1574 = vmatpush1.bf16.msra.mxu0 %v1489
        %1575 = vmatprep.subr.bf16.mxu0 0
        %1576 = vmatpush1.bf16.msra.mxu0 %v1488
        %1577 = vmatprep.subr.bf16.mxu0 0
        %1578 = vmatpush1.bf16.msra.mxu0 %v1487
        %1579 = vmatprep.subr.bf16.mxu0 0
        %1580 = vmatpush1.bf16.msra.mxu0 %v1486
        %1581 = vmatprep.subr.bf16.mxu0 0
        %1582 = vmatpush2.bf16.msra.mxu0 0
        %1583 = vmatprep.subr.bf16.mxu0 0
        %1584 = vmatpush2.bf16.msra.mxu0 0
        %1585 = vmatprep.subr.bf16.mxu0 0
        %1586 = vmatpush2.bf16.msra.mxu0 0
        %1587 = vmatprep.subr.bf16.mxu0 0
        %1588 = vmatpush2.bf16.msra.mxu0 0
        %1589 = vmatprep.subr.bf16.mxu0 0
        %1590 = vmatpush2.bf16.msra.mxu0 0
        %1591 = vmatprep.subr.bf16.mxu0 0
        %1592 = vmatpush2.bf16.msra.mxu0 0
        %1593 = vmatprep.subr.bf16.mxu0 0
        %1594 = vmatpush2.bf16.msra.mxu0 0
        %1595 = vmatprep.subr.bf16.mxu0 0
        %1596 = vmatpush2.bf16.msra.mxu0 0
        %1597 = vmatprep.mubr.bf16.mxu0 0
        %1598 = vmatmul.mubr.bf16.gmra.mxu0 %v1428
        %v1599 = vpop.f32.mrf.mxu0
        %v1600 = vadd.f32 %v1452, %v1599
        %v1601 = vpop.f32.mrf.mxu0
        %v1602 = vpop.f32.mrf.mxu0
        %v1603 = vadd.f32 %v1452, %v1602
        %v1604 = vpop.f32.mrf.mxu0
        %1605 = vdwg.mxu0
        %v1606 = vxor.u32 %v1600, 2147483648
        %v1607 = vxor.u32 %v1603, 2147483648
        %v1608 = vmul.f32 %v1606, 1.442695
        %v1609 = vpow.pop %v1608
        %v1610 = vmul.f32 %v1607, 1.442695
        %v1611 = vpow.pop %v1610
        %v1612 = vadd.f32 %v1609, 1.0
        %v1613 = vadd.f32 %v1611, 1.0
        %v1614 = vrcp.pop %v1612
        %v1615 = vmul.f32 1.0, %v1614
        %v1616 = vrcp.pop %v1613
        %v1617 = vmul.f32 1.0, %v1616
        %v1618 = vpack.c.bf16 %v1617, %v1615
        %v1620 = vunpack.c.l.b16 %v1618
        %v1621 = vunpack.c.h.b16 %v1618
        %v1622 = vpack.c.b16 %v1620, %v1620
        %v1623 = vpack.c.b16 %v1621, %v1621
        %1626 = vst [vmem:[%s685 + $0x4] sm:$0xf] %v1622
        %1627 = vst [vmem:[%s685 + $0x14] sm:$0xf] %v1623
        %1628 = vmatprep.subr.bf16.mxu0 0
        %1629 = vmatpush1.bf16.msra.mxu0 %v1493
        %1630 = vmatprep.subr.bf16.mxu0 0
        %1631 = vmatpush1.bf16.msra.mxu0 %v1492
        %1632 = vmatprep.subr.bf16.mxu0 0
        %1633 = vmatpush1.bf16.msra.mxu0 %v1491
        %1634 = vmatprep.subr.bf16.mxu0 0
        %1635 = vmatpush1.bf16.msra.mxu0 %v1490
        %1636 = vmatprep.subr.bf16.mxu0 0
        %1637 = vmatpush1.bf16.msra.mxu0 %v1489
        %1638 = vmatprep.subr.bf16.mxu0 0
        %1639 = vmatpush1.bf16.msra.mxu0 %v1488
        %1640 = vmatprep.subr.bf16.mxu0 0
        %1641 = vmatpush1.bf16.msra.mxu0 %v1487
        %1642 = vmatprep.subr.bf16.mxu0 0
        %1643 = vmatpush1.bf16.msra.mxu0 %v1486
        %1644 = vmatprep.subr.bf16.mxu0 0
        %1645 = vmatpush2.bf16.msra.mxu0 0
        %1646 = vmatprep.subr.bf16.mxu0 0
        %1647 = vmatpush2.bf16.msra.mxu0 0
        %1648 = vmatprep.subr.bf16.mxu0 0
        %1649 = vmatpush2.bf16.msra.mxu0 0
        %1650 = vmatprep.subr.bf16.mxu0 0
        %1651 = vmatpush2.bf16.msra.mxu0 0
        %1652 = vmatprep.subr.bf16.mxu0 0
        %1653 = vmatpush2.bf16.msra.mxu0 0
        %1654 = vmatprep.subr.bf16.mxu0 0
        %1655 = vmatpush2.bf16.msra.mxu0 0
        %1656 = vmatprep.subr.bf16.mxu0 0
        %1657 = vmatpush2.bf16.msra.mxu0 0
        %1658 = vmatprep.subr.bf16.mxu0 0
        %1659 = vmatpush2.bf16.msra.mxu0 0
        %1660 = vmatprep.mubr.bf16.mxu0 0
        %1661 = vmatmul.mubr.bf16.gmra.mxu0 %v1429
        %v1662 = vpop.f32.mrf.mxu0
        %v1663 = vadd.f32 %v1452, %v1662
        %v1664 = vpop.f32.mrf.mxu0
        %v1665 = vpop.f32.mrf.mxu0
        %v1666 = vadd.f32 %v1452, %v1665
        %v1667 = vpop.f32.mrf.mxu0
        %1668 = vdwg.mxu0
        %v1669 = vxor.u32 %v1663, 2147483648
        %v1670 = vxor.u32 %v1666, 2147483648
        %v1671 = vmul.f32 %v1669, 1.442695
        %v1672 = vpow.pop %v1671
        %v1673 = vmul.f32 %v1670, 1.442695
        %v1674 = vpow.pop %v1673
        %v1675 = vadd.f32 %v1672, 1.0
        %v1676 = vadd.f32 %v1674, 1.0
        %v1677 = vrcp.pop %v1675
        %v1678 = vmul.f32 1.0, %v1677
        %v1679 = vrcp.pop %v1676
        %v1680 = vmul.f32 1.0, %v1679
        %v1681 = vpack.c.bf16 %v1680, %v1678
        %v1683 = vunpack.c.l.b16 %v1681
        %v1684 = vunpack.c.h.b16 %v1681
        %v1685 = vpack.c.b16 %v1683, %v1683
        %v1686 = vpack.c.b16 %v1684, %v1684
        %1689 = vst [vmem:[%s685 + $0x8] sm:$0xf] %v1685
        %1690 = vst [vmem:[%s685 + $0x18] sm:$0xf] %v1686
        %1691 = vmatprep.subr.bf16.mxu0 0
        %1692 = vmatpush1.bf16.msra.mxu0 %v1493
        %1693 = vmatprep.subr.bf16.mxu0 0
        %1694 = vmatpush1.bf16.msra.mxu0 %v1492
        %1695 = vmatprep.subr.bf16.mxu0 0
        %1696 = vmatpush1.bf16.msra.mxu0 %v1491
        %1697 = vmatprep.subr.bf16.mxu0 0
        %1698 = vmatpush1.bf16.msra.mxu0 %v1490
        %1699 = vmatprep.subr.bf16.mxu0 0
        %1700 = vmatpush1.bf16.msra.mxu0 %v1489
        %1701 = vmatprep.subr.bf16.mxu0 0
        %1702 = vmatpush1.bf16.msra.mxu0 %v1488
        %1703 = vmatprep.subr.bf16.mxu0 0
        %1704 = vmatpush1.bf16.msra.mxu0 %v1487
        %1705 = vmatprep.subr.bf16.mxu0 0
        %1706 = vmatpush1.bf16.msra.mxu0 %v1486
        %1707 = vmatprep.subr.bf16.mxu0 0
        %1708 = vmatpush2.bf16.msra.mxu0 0
        %1709 = vmatprep.subr.bf16.mxu0 0
        %1710 = vmatpush2.bf16.msra.mxu0 0
        %1711 = vmatprep.subr.bf16.mxu0 0
        %1712 = vmatpush2.bf16.msra.mxu0 0
        %1713 = vmatprep.subr.bf16.mxu0 0
        %1714 = vmatpush2.bf16.msra.mxu0 0
        %1715 = vmatprep.subr.bf16.mxu0 0
        %1716 = vmatpush2.bf16.msra.mxu0 0
        %1717 = vmatprep.subr.bf16.mxu0 0
        %1718 = vmatpush2.bf16.msra.mxu0 0
        %1719 = vmatprep.subr.bf16.mxu0 0
        %1720 = vmatpush2.bf16.msra.mxu0 0
        %1721 = vmatprep.subr.bf16.mxu0 0
        %1722 = vmatpush2.bf16.msra.mxu0 0
        %1723 = vmatprep.mubr.bf16.mxu0 0
        %1724 = vmatmul.mubr.bf16.gmra.mxu0 %v1430
        %v1725 = vpop.f32.mrf.mxu0
        %v1726 = vadd.f32 %v1452, %v1725
        %v1727 = vpop.f32.mrf.mxu0
        %v1728 = vpop.f32.mrf.mxu0
        %v1729 = vadd.f32 %v1452, %v1728
        %v1730 = vpop.f32.mrf.mxu0
        %1731 = vdwg.mxu0
        %v1732 = vxor.u32 %v1726, 2147483648
        %v1733 = vxor.u32 %v1729, 2147483648
        %v1734 = vmul.f32 %v1732, 1.442695
        %v1735 = vpow.pop %v1734
        %v1736 = vmul.f32 %v1733, 1.442695
        %v1737 = vpow.pop %v1736
        %v1738 = vadd.f32 %v1735, 1.0
        %v1739 = vadd.f32 %v1737, 1.0
        %v1740 = vrcp.pop %v1738
        %v1741 = vmul.f32 1.0, %v1740
        %v1742 = vrcp.pop %v1739
        %v1743 = vmul.f32 1.0, %v1742
        %v1744 = vpack.c.bf16 %v1743, %v1741
        %v1746 = vunpack.c.l.b16 %v1744
        %v1747 = vunpack.c.h.b16 %v1744
        %v1748 = vpack.c.b16 %v1746, %v1746
        %v1749 = vpack.c.b16 %v1747, %v1747
        %1752 = vst [vmem:[%s685 + $0xc] sm:$0xf] %v1748
        %1753 = vst [vmem:[%s685 + $0x1c] sm:$0xf] %v1749
        %s1754 = sand.u32 %s355, 1
        %s1755 = scalar_lea.sflag [#allocation4], %s1754
        %s1756 = sand.u32 %s355, 1
        %s1757 = smul.addr %s1756, 32
        %s1758 = scalar_lea.vmem [#allocation16], %s1757
        %s1759 = sand.u32 %s43, 1
        %s1760 = scalar_lea.sflag [#allocation18], %s1759
        %s1761 = sand.u32 %s381, 1
        %s1762 = smul.addr %s1761, 64
        %s1763 = scalar_lea.vmem [#allocation17], %s1762
        %s1764 = sand.u32 %s43, 1
        %s1765 = scalar_lea.sflag [#allocation18], %s1764
        %s1766 = sand.u32 %s407, 1
        %s1767 = smul.addr %s1766, 32
        %s1768 = scalar_lea.vmem [#allocation19], %s1767
        // Predicated region
        $region109: #{tpu_custom_call.1} parent=75 // pred_check
          %p1769 = pneg %p365
        $region110: #{tpu_custom_call.1} parent=75 // pred_check_branch
          %1771 = sbr.rel (%p1769) target = $region112
        $region111: #{tpu_custom_call.1} parent=75 // pred_region
          %s1772 = smul.u32 2, %s43
          %s1774 = ssub.s32 512, 512
          %1775 = vsyncadd %s1755, %s1774
          %s1776 = smul.addr %s1772, 2
          %s1777 = smul.addr %s1776, 128
          %s1778 = scalar_lea.hbm %s14, %s1777
          %s1779 = sshll.u32 %s1758, 4
          %s1780 = int_to_ptr.vmem [resolvable:$true] %s1779
          %1785 = dma.vmem_to_hbm [thread:$0]  %s1780, 512, %s1778, %s1755, 256, 256, 16
        $region112: #{tpu_custom_call.1} parent=75 // pred_fallthru
          _
        // Predicated region
        $region113: #{tpu_custom_call.1} parent=75 // pred_check
          %p1786 = pneg %p391
        $region114: #{tpu_custom_call.1} parent=75 // pred_check_branch
          %1788 = sbr.rel (%p1786) target = $region116
        $region115: #{tpu_custom_call.1} parent=75 // pred_region
          %s1789 = smul.u32 2, %s43
          %s1791 = ssub.s32 1024, 1024
          %1792 = vsyncadd %s1760, %s1791
          %s1793 = smul.addr %s1789, 4
          %s1794 = smul.addr %s1793, 128
          %s1795 = scalar_lea.hbm %s15, %s1794
          %s1796 = sshll.u32 %s1763, 4
          %s1797 = int_to_ptr.vmem [resolvable:$true] %s1796
          %1802 = dma.vmem_to_hbm [thread:$0]  %s1797, 1024, %s1795, %s1760, 512, 512, 32
        $region116: #{tpu_custom_call.1} parent=75 // pred_fallthru
          _
        // Predicated region
        $region117: #{tpu_custom_call.1} parent=75 // pred_check
          %p1803 = pneg %p417
        $region118: #{tpu_custom_call.1} parent=75 // pred_check_branch
          %1805 = sbr.rel (%p1803) target = $region120
        $region119: #{tpu_custom_call.1} parent=75 // pred_region
          %s1806 = smul.u32 2, %s43
          %s1808 = ssub.s32 512, 512
          %1809 = vsyncadd %s1765, %s1808
          %s1810 = smul.addr %s1806, 4
          %s1811 = smul.addr %s1810, 64
          %s1812 = scalar_lea.hbm %s16, %s1811
          %s1813 = sshll.u32 %s1768, 4
          %s1814 = int_to_ptr.vmem [resolvable:$true] %s1813
          %1819 = dma.vmem_to_hbm [thread:$0]  %s1814, 512, %s1812, %s1765, 256, 256, 16
        $region120: #{tpu_custom_call.1} parent=75 // pred_fallthru
          _
      $region76: #{tpu_custom_call.1} parent=5 // pred_fallthru
        _
      %p1820 = scmp.le.s32.totalorder 2, %s38
      // Predicated region
      $region121: #{tpu_custom_call.1} parent=5 // pred_check
        %p1821 = pneg %p1820
      $region122: #{tpu_custom_call.1} parent=5 // pred_check_branch
        %1823 = sbr.rel (%p1821) target = $region124
      $region123: #{tpu_custom_call.1} parent=5 // pred_region
        %s1824 = ssub.s32 %s38, 2
        // Predicated region
        $region125: #{tpu_custom_call.1} parent=123 // pred_check
          %p1825 = pneg %p371
        $region126: #{tpu_custom_call.1} parent=123 // pred_check_branch
          %1827 = sbr.rel (%p1825) target = $region128
        $region127: #{tpu_custom_call.1} parent=123 // pred_region
          %s1828 = sand.u32 %s356, 1
          %s1829 = scalar_lea.sflag [#allocation4], %s1828
          %s1830 = sand.u32 %s356, 1
          %s1831 = smul.addr %s1830, 32
          %s1832 = scalar_lea.vmem [#allocation16], %s1831
          %1833 = dma.done %s1829, 512
        $region128: #{tpu_custom_call.1} parent=123 // pred_fallthru
          _
        // Predicated region
        $region129: #{tpu_custom_call.1} parent=123 // pred_check
          %p1834 = pneg %p397
        $region130: #{tpu_custom_call.1} parent=123 // pred_check_branch
          %1836 = sbr.rel (%p1834) target = $region132
        $region131: #{tpu_custom_call.1} parent=123 // pred_region
          %s1837 = sand.u32 %s44, 1
          %s1838 = scalar_lea.sflag [#allocation18], %s1837
          %s1839 = sand.u32 %s382, 1
          %s1840 = smul.addr %s1839, 64
          %s1841 = scalar_lea.vmem [#allocation17], %s1840
          %1842 = dma.done %s1838, 1024
        $region132: #{tpu_custom_call.1} parent=123 // pred_fallthru
          _
        // Predicated region
        $region133: #{tpu_custom_call.1} parent=123 // pred_check
          %p1843 = pneg %p423
        $region134: #{tpu_custom_call.1} parent=123 // pred_check_branch
          %1845 = sbr.rel (%p1843) target = $region136
        $region135: #{tpu_custom_call.1} parent=123 // pred_region
          %s1846 = sand.u32 %s44, 1
          %s1847 = scalar_lea.sflag [#allocation18], %s1846
          %s1848 = sand.u32 %s408, 1
          %s1849 = smul.addr %s1848, 32
          %s1850 = scalar_lea.vmem [#allocation19], %s1849
          %1851 = dma.done %s1847, 512
        $region136: #{tpu_custom_call.1} parent=123 // pred_fallthru
          _
      $region124: #{tpu_custom_call.1} parent=5 // pred_fallthru
        _
    $region6: #{tpu_custom_call.1} parent=1 // loop_footer
      %s42 = sadd.s32 1, %s38
    $region7: #{tpu_custom_call.1} parent=1 // loop_footer_branch
      %37 = sbr.rel target = $region3
    $region8: #{tpu_custom_call.1} parent=1 // loop_exit
      _
    %1852 = vsyncpa [#allocation3], 1
    %s1853 = scalar_lea.sflag [#allocation3], 1
    %1854 = vsyncpa %s1853, 1
    %1855 = vsyncpa [#allocation6], 1
    %s1856 = scalar_lea.sflag [#allocation6], 1
    %1857 = vsyncpa %s1856, 1
    %1858 = vsyncpa [#allocation9], 1
    %1859 = vsyncpa [#allocation12], 1
    %1860 = vsyncpa [#allocation15], 1
    %1861 = vsyncpa [#allocation4], 1
    %s1862 = scalar_lea.sflag [#allocation4], 1
    %1863 = vsyncpa %s1862, 1
    %1864 = vsyncpa [#allocation18], 1
    %s1865 = scalar_lea.sflag [#allocation18], 1
    %1866 = vsyncpa %s1865, 1

</llo_original>
